<compile_context>
chip_gen: v6e
topology: v6e:2x2x1
jax: 0.10.0
libtpu: 0.0.40
codegen_flags: <defaults>
</compile_context>

<pallas_src>
import functools

import jax
import jax.numpy as jnp
from jax.experimental import pallas as pl
from jax.experimental.pallas import tpu as pltpu

DROPOUT_P = 0.2
N_EMBD = 384  # from the module spec


def _round_up(a: int, b: int) -> int:
    return ((a + b - 1) // b) * b


def _ffwd_kernel(x_ref, w1_ref, b1_ref, w2_ref, b2_ref, mask_ref, o_ref, acc_ref,
                 *, apply_dropout):
    # x_ref: (tm, C)   w1_ref: (C, tH)   b1_ref: (1, tH)
    # w2_ref: (tH, C)  b2_ref: (1, C)    mask_ref/o_ref: (tm, C)
    # acc_ref: (tm, C) f32 scratch accumulator over the hidden-tile axis.
    h_idx = pl.program_id(1)

    @pl.when(h_idx == 0)
    def _():
        acc_ref[...] = jnp.zeros_like(acc_ref)

    h = jnp.dot(x_ref[...], w1_ref[...], preferred_element_type=jnp.float32)
    h = jnp.maximum(h + b1_ref[...], 0.0)  # ReLU on the hidden tile
    acc_ref[...] += jnp.dot(h, w2_ref[...], preferred_element_type=jnp.float32)

    @pl.when(h_idx == pl.num_programs(1) - 1)
    def _():
        y = acc_ref[...] + b2_ref[...]
        if apply_dropout:
            # mask is pre-scaled: 0 (dropped) or 1/(1-p) (kept) -> single multiply.
            y = y * mask_ref[...]
        o_ref[...] = y.astype(o_ref.dtype)


def feedforward(x, w1, b1, w2, b2, *, key=None, training=True, p=DROPOUT_P,
                tm=256, th=512):
    """x: (B, T, C) float32. w1: (C, 4C), b1: (4C,), w2: (4C, C), b2: (C,)."""
    B, T, C = x.shape
    H = w1.shape[1]
    M = B * T

    # Row tile: as big as possible (<= tm), multiple of 8 sublanes.
    tm = min(tm, _round_up(M, 8))
    Mp = _round_up(M, tm)

    # Hidden tile: bounds the f32 intermediate and the per-step weight slabs.
    th = min(th, H)
    assert H % th == 0 and th % 128 == 0, "hidden tile must divide H and be lane-aligned"
    assert C % 128 == 0, "n_embd must be a multiple of 128 for lane-dense blocks"

    x2d = x.reshape(M, C)
    if Mp != M:
        x2d = jnp.pad(x2d, ((0, Mp - M), (0, 0)))

    b1_2d = b1.reshape(1, H)
    b2_2d = b2.reshape(1, C)

    apply_dropout = bool(training) and float(p) > 0.0
    if apply_dropout:
        if key is None:
            key = jax.random.PRNGKey(0)
        keep = jax.random.bernoulli(key, 1.0 - float(p), (Mp, C))
        mask_scale = keep.astype(x.dtype) * jnp.asarray(1.0 / (1.0 - float(p)), x.dtype)
    else:
        mask_scale = jnp.ones((Mp, C), x.dtype)

    kernel = functools.partial(_ffwd_kernel, apply_dropout=apply_dropout)
    grid = (Mp // tm, H // th)

    # VMEM budget: double-buffered blocks + the f32 accumulator (with headroom).
    block_bytes = 4 * (tm * C          # x tile
                       + C * th + th   # w1 tile + b1 tile
                       + th * C + C    # w2 tile + b2
                       + tm * C        # dropout mask tile
                       + tm * C)       # output tile
    vmem_limit = min(max(2 * block_bytes + 4 * tm * C + (4 << 20), 16 << 20), 48 << 20)

    cost = pl.CostEstimate(
        flops=2 * 2 * Mp * C * H,
        transcendentals=0,
        bytes_accessed=4 * (3 * Mp * C + 2 * C * H + H + C),
    )

    out2d = pl.pallas_call(
        kernel,
        out_shape=jax.ShapeDtypeStruct((Mp, C), x.dtype),
        grid=grid,
        in_specs=[
            pl.BlockSpec((tm, C), lambda i, h: (i, 0)),   # x row tile
            pl.BlockSpec((C, th), lambda i, h: (0, h)),   # w1 column tile
            pl.BlockSpec((1, th), lambda i, h: (0, h)),   # b1 tile
            pl.BlockSpec((th, C), lambda i, h: (h, 0)),   # w2 row tile
            pl.BlockSpec((1, C), lambda i, h: (0, 0)),    # b2
            pl.BlockSpec((tm, C), lambda i, h: (i, 0)),   # dropout scale tile
        ],
        out_specs=pl.BlockSpec((tm, C), lambda i, h: (i, 0)),
        scratch_shapes=[pltpu.VMEM((tm, C), jnp.float32)],
        compiler_params=pltpu.CompilerParams(
            # rows independent -> shard across TensorCores (v7x megacore);
            # hidden axis is the accumulator/reduction axis -> serial.
            dimension_semantics=("parallel", "arbitrary"),
            vmem_limit_bytes=vmem_limit,
        ),
        cost_estimate=cost,
    )(x2d, w1, b1_2d, w2, b2_2d, mask_scale)

    return out2d[:M].reshape(B, T, C)


if __name__ == "__main__":
    # Small shapes consistent with the module: batch=2, seq=8, n_embd=384 (hidden = 1536).
    B, T, C = 2, 8, N_EMBD
    H = 4 * C

    key = jax.random.PRNGKey(0)
    kx, k1, k2, k3, k4, kdrop = jax.random.split(key, 6)

    x = jax.random.normal(kx, (B, T, C), dtype=jnp.float32)

    # Param init mimicking nn.Linear: U(-1/sqrt(fan_in), 1/sqrt(fan_in)).
    lim1 = 1.0 / jnp.sqrt(jnp.float32(C))
    lim2 = 1.0 / jnp.sqrt(jnp.float32(H))
    w1 = jax.random.uniform(k1, (C, H), jnp.float32, -lim1, lim1)
    b1 = jax.random.uniform(k2, (H,), jnp.float32, -lim1, lim1)
    w2 = jax.random.uniform(k3, (H, C), jnp.float32, -lim2, lim2)
    b2 = jax.random.uniform(k4, (C,), jnp.float32, -lim2, lim2)

    # Training-mode forward (dropout active, deterministic mask key).
    out_train = feedforward(x, w1, b1, w2, b2, key=kdrop, training=True)
    out_train = jax.block_until_ready(out_train)
    assert out_train.shape == (B, T, C)

    # Eval-mode sanity check against a pure-JAX reference (dropout disabled).
    out_eval = feedforward(x, w1, b1, w2, b2, training=False)
    out_eval = jax.block_until_ready(out_eval)
    ref_eval = jnp.maximum(x.reshape(-1, C) @ w1 + b1, 0.0) @ w2 + b2
    assert jnp.allclose(out_eval.reshape(-1, C), ref_eval, atol=2e-2, rtol=2e-2), (
        float(jnp.max(jnp.abs(out_eval.reshape(-1, C) - ref_eval))))

    print("KERNEL_OK")
</pallas_src>

<mosaic_0001>
module attributes {stable_mosaic.version = 11 : i64} {
  func.func @_ffwd_kernel(%arg0: i32, %arg1: i32, %arg2: memref<16x384xf32, #tpu.memory_space<vmem>>, %arg3: memref<384x512xf32, #tpu.memory_space<vmem>>, %arg4: memref<1x512xf32, #tpu.memory_space<vmem>>, %arg5: memref<512x384xf32, #tpu.memory_space<vmem>>, %arg6: memref<1x384xf32, #tpu.memory_space<vmem>>, %arg7: memref<16x384xf32, #tpu.memory_space<vmem>>, %arg8: memref<16x384xf32, #tpu.memory_space<vmem>>, %arg9: memref<16x384xf32, #tpu.memory_space<vmem>>) attributes {dimension_semantics = [#tpu.dimension_semantics<parallel>, #tpu.dimension_semantics<arbitrary>], iteration_bounds = array<i64: 1, 3>, scalar_prefetch = 0 : i64, scratch_operands = 1 : i64, tpu.core_type = #tpu.core_type<tc>, window_params = [{transform_indices = @transform_0, window_bounds = array<i64: 16, 384>}, {transform_indices = @transform_1, window_bounds = array<i64: 384, 512>}, {transform_indices = @transform_2, window_bounds = array<i64: 1, 512>}, {transform_indices = @transform_3, window_bounds = array<i64: 512, 384>}, {pipeline_mode = #tpu.pipeline_mode<synchronous>, transform_indices = @transform_4, window_bounds = array<i64: 1, 384>}, {transform_indices = @transform_5, window_bounds = array<i64: 16, 384>}, {transform_indices = @transform_6, window_bounds = array<i64: 16, 384>}]} {
    %c0_i32 = arith.constant 0 : i32
    %0 = arith.cmpi eq, %arg1, %c0_i32 : i32
    %1 = arith.extui %0 : i1 to i32
    %c0_i32_0 = arith.constant 0 : i32
    %2 = arith.cmpi ne, %1, %c0_i32_0 : i32
    scf.if %2 {
      %cst_15 = arith.constant 0.000000e+00 : f32
      %19 = vector.broadcast %cst_15 : f32 to vector<16x384xf32>
      %c0_16 = arith.constant 0 : index
      %c0_17 = arith.constant 0 : index
      %20 = vector.load %arg9[%c0_16, %c0_17] : memref<16x384xf32, #tpu.memory_space<vmem>>, vector<16x384xf32>
      tpu.vector_store %arg9[%c0_16, %c0_17], %19 {strides = array<i32>} : memref<16x384xf32, #tpu.memory_space<vmem>>, vector<16x384xf32>,
    } else {
    }
    %c0 = arith.constant 0 : index
    %c0_1 = arith.constant 0 : index
    %3 = vector.load %arg2[%c0, %c0_1] : memref<16x384xf32, #tpu.memory_space<vmem>>, vector<16x384xf32>
    %c0_2 = arith.constant 0 : index
    %c0_3 = arith.constant 0 : index
    %4 = vector.load %arg3[%c0_2, %c0_3] : memref<384x512xf32, #tpu.memory_space<vmem>>, vector<384x512xf32>
    %cst = arith.constant dense<0.000000e+00> : vector<16x512xf32>
    %5 = tpu.matmul %3, %4, %cst {dimension_numbers = #tpu.dot_dimension_numbers<[1], [0], [0], [1], [0, 0, 1, 1], [], []>} : vector<16x384xf32>, vector<384x512xf32>, vector<16x512xf32> -> vector<16x512xf32>
    %c0_4 = arith.constant 0 : index
    %c0_5 = arith.constant 0 : index
    %6 = vector.load %arg4[%c0_4, %c0_5] : memref<1x512xf32, #tpu.memory_space<vmem>>, vector<1x512xf32>
    %7 = vector.broadcast %6 : vector<1x512xf32> to vector<16x512xf32>
    %8 = arith.addf %5, %7 : vector<16x512xf32>
    %cst_6 = arith.constant 0.000000e+00 : f32
    %9 = vector.broadcast %cst_6 : f32 to vector<16x512xf32>
    %10 = arith.maximumf %8, %9 : vector<16x512xf32>
    %c0_7 = arith.constant 0 : index
    %c0_8 = arith.constant 0 : index
    %11 = vector.load %arg9[%c0_7, %c0_8] : memref<16x384xf32, #tpu.memory_space<vmem>>, vector<16x384xf32>
    %c0_9 = arith.constant 0 : index
    %c0_10 = arith.constant 0 : index
    %12 = vector.load %arg5[%c0_9, %c0_10] : memref<512x384xf32, #tpu.memory_space<vmem>>, vector<512x384xf32>
    %cst_11 = arith.constant dense<0.000000e+00> : vector<16x384xf32>
    %13 = tpu.matmul %10, %12, %cst_11 {dimension_numbers = #tpu.dot_dimension_numbers<[1], [0], [0], [1], [0, 0, 1, 1], [], []>} : vector<16x512xf32>, vector<512x384xf32>, vector<16x384xf32> -> vector<16x384xf32>
    %14 = arith.addf %11, %13 : vector<16x384xf32>
    %c0_12 = arith.constant 0 : index
    %c0_13 = arith.constant 0 : index
    %15 = vector.load %arg9[%c0_12, %c0_13] : memref<16x384xf32, #tpu.memory_space<vmem>>, vector<16x384xf32>
    tpu.vector_store %arg9[%c0_12, %c0_13], %14 {strides = array<i32>} : memref<16x384xf32, #tpu.memory_space<vmem>>, vector<16x384xf32>,
    %c2_i32 = arith.constant 2 : i32
    %16 = arith.cmpi eq, %arg1, %c2_i32 : i32
    %17 = arith.extui %16 : i1 to i32
    %c0_i32_14 = arith.constant 0 : i32
    %18 = arith.cmpi ne, %17, %c0_i32_14 : i32
    scf.if %18 {
      %c0_15 = arith.constant 0 : index
      %c0_16 = arith.constant 0 : index
      %19 = vector.load %arg9[%c0_15, %c0_16] : memref<16x384xf32, #tpu.memory_space<vmem>>, vector<16x384xf32>
      %c0_17 = arith.constant 0 : index
      %c0_18 = arith.constant 0 : index
      %20 = vector.load %arg6[%c0_17, %c0_18] : memref<1x384xf32, #tpu.memory_space<vmem>>, vector<1x384xf32>
      %21 = vector.broadcast %20 : vector<1x384xf32> to vector<16x384xf32>
      %22 = arith.addf %19, %21 : vector<16x384xf32>
      %c0_19 = arith.constant 0 : index
      %c0_20 = arith.constant 0 : index
      %23 = vector.load %arg7[%c0_19, %c0_20] : memref<16x384xf32, #tpu.memory_space<vmem>>, vector<16x384xf32>
      %24 = arith.mulf %22, %23 : vector<16x384xf32>
      %c0_21 = arith.constant 0 : index
      %c0_22 = arith.constant 0 : index
      %25 = vector.load %arg8[%c0_21, %c0_22] : memref<16x384xf32, #tpu.memory_space<vmem>>, vector<16x384xf32>
      tpu.vector_store %arg8[%c0_21, %c0_22], %24 {strides = array<i32>} : memref<16x384xf32, #tpu.memory_space<vmem>>, vector<16x384xf32>,
    } else {
    }
    return
  }
  func.func @transform_0(%arg0: i32, %arg1: i32) -> (i32, i32) {
    %c0_i32 = arith.constant 0 : i32
    %c0_i32_0 = arith.constant 0 : i32
    return %arg0, %c0_i32 : i32, i32
  }
  func.func @transform_1(%arg0: i32, %arg1: i32) -> (i32, i32) {
    %c0_i32 = arith.constant 0 : i32
    %c0_i32_0 = arith.constant 0 : i32
    return %c0_i32, %arg1 : i32, i32
  }
  func.func @transform_2(%arg0: i32, %arg1: i32) -> (i32, i32) {
    %c0_i32 = arith.constant 0 : i32
    %c0_i32_0 = arith.constant 0 : i32
    return %c0_i32, %arg1 : i32, i32
  }
  func.func @transform_3(%arg0: i32, %arg1: i32) -> (i32, i32) {
    %c0_i32 = arith.constant 0 : i32
    %c0_i32_0 = arith.constant 0 : i32
    return %arg1, %c0_i32 : i32, i32
  }
  func.func @transform_4(%arg0: i32, %arg1: i32) -> (i32, i32) {
    %c0_i32 = arith.constant 0 : i32
    %c0_i32_0 = arith.constant 0 : i32
    %c0_i32_1 = arith.constant 0 : i32
    return %c0_i32, %c0_i32_0 : i32, i32
  }
  func.func @transform_5(%arg0: i32, %arg1: i32) -> (i32, i32) {
    %c0_i32 = arith.constant 0 : i32
    %c0_i32_0 = arith.constant 0 : i32
    return %arg0, %c0_i32 : i32, i32
  }
  func.func @transform_6(%arg0: i32, %arg1: i32) -> (i32, i32) {
    %c0_i32 = arith.constant 0 : i32
    %c0_i32_0 = arith.constant 0 : i32
    return %arg0, %c0_i32 : i32, i32
  }
}

</mosaic_0001>

<llo_original>
// kernel: tpu_custom_call.1
$region0: #{tpu_custom_call.1}
  #allocation0 [shape = 'u32[]', space=smem, size = 0x4, offset = 0x4, fixed_abs, tag = 'smem constant byte address 0x4 - core index']
  #allocation1 [shape = 'u32[144,128]{1,0:T(1,128)}', space=vmem, size = 0x12000, scoped, tag = 'internal scratch']
  #allocation2 [shape = 'f32[16,384]{1,0:T(8,128)}', space=vmem, size = 0x6000, scoped, tag = 'scratch operand']
  %s0 = inlined_call_operand.hbm [shape: f32[16,384], index: 0, kind: input, shape index: {}]
  %s1 = inlined_call_operand.hbm [shape: f32[384,1536], index: 1, kind: input, shape index: {}]
  %s2 = inlined_call_operand.hbm [shape: f32[1,1536], index: 2, kind: input, shape index: {}]
  %s3 = inlined_call_operand.hbm [shape: f32[1536,384], index: 3, kind: input, shape index: {}]
  %s4 = inlined_call_operand.hbm [shape: f32[1,384], index: 4, kind: input, shape index: {}]
  %s5 = inlined_call_operand.hbm [shape: f32[16,384], index: 5, kind: input, shape index: {}]
  %s6 = inlined_call_operand.hbm [shape: f32[16,384], index: 6, kind: output, shape index: {}]
  %s7 = sld [smem:[#allocation0]]
  $region89: #{tpu_custom_call.1} parent=0
    _
  %s9 = ssub.s32 1, %s7
  %s10 = scalar_select 0, %s9, %s7
  $region1: #{tpu_custom_call.1} parent=0
    #allocation3 [shape = 'u8[24576]{0}', space=vmem, size = 0x6000, scoped, tag = 'input window, operand 0, single buffered']
    #allocation4 [shape = 's32[2]{0}', space=sflag, size = 0x8, scoped, tag = 'scoped memory for tpu_custom_call.1']
    #allocation5 [shape = 's32[2]{0}', space=sflag, size = 0x8, scoped, tag = 'scoped memory for tpu_custom_call.1']
    #allocation6 [shape = 'u8[1572864]{0}', space=vmem, size = 0x180000, scoped, tag = 'input window, operand 1']
    #allocation7 [shape = 's32[2]{0}', space=sflag, size = 0x8, scoped, tag = 'scoped memory for tpu_custom_call.1']
    #allocation8 [shape = 'u8[4096]{0}', space=vmem, size = 0x1000, scoped, tag = 'input window, operand 2']
    #allocation9 [shape = 'u8[1572864]{0}', space=vmem, size = 0x180000, scoped, tag = 'input window, operand 3']
    #allocation10 [shape = 's32[2]{0}', space=sflag, size = 0x8, scoped, tag = 'scoped memory for tpu_custom_call.1']
    #allocation11 [shape = 'u8[1536]{0}', space=vmem, size = 0x800, scoped, tag = 'input window, operand 4, single buffered']
    #allocation12 [shape = 'u8[24576]{0}', space=vmem, size = 0x6000, scoped, tag = 'input window, operand 5, single buffered']
    #allocation13 [shape = 's32[1]{0}', space=sflag, size = 0x4, scoped, tag = 'scoped memory for tpu_custom_call.1']
    #allocation14 [shape = 'u8[24576]{0}', space=vmem, size = 0x6000, scoped, tag = 'output window, operand 0, single buffered']
    %11 = vsyncpa [#allocation4], 0
    %12 = vsyncpa [#allocation7], 0
    %s13 = scalar_lea.sflag [#allocation7], 1
    %14 = vsyncpa %s13, 0
    %15 = vsyncpa [#allocation10], 0
    %s16 = scalar_lea.sflag [#allocation10], 1
    %17 = vsyncpa %s16, 0
    %18 = vsyncpa [#allocation13], 0
    %19 = vsyncpa [#allocation5], 0
    loop: start=0, step=1, limit=5
    $region2: #{tpu_custom_call.1} parent=1 // loop_pre_header
      _
    $region3: #{tpu_custom_call.1} parent=1 // loop_header
      %s21 = sphi 0, %s25
      %p22 = scmp.ge.s32.totalorder %s21, 5
      %s28 = sphi 0, %s40
      %s29 = sphi 0, %s36
      %s30 = sphi 0, %s28
      %s31 = sphi 0, %s29
      %s32 = sphi 0, %s30
      %s33 = sphi 0, %s31
      %s43 = sphi 0, %s45
      %s46 = sphi 0, %s43
      %s47 = sphi 0, %s46
      %s63 = sphi 0, %s47
      %s69 = sphi 0, %s71
      %s72 = sphi 0, %s69
      %s73 = sphi 0, %s72
      %s89 = sphi 0, %s73
      %s95 = sphi 0, %s97
      %s98 = sphi 0, %s95
      %s99 = sphi 0, %s98
      %s115 = sphi 0, %s99
      %s121 = sphi 0, %s123
      %s124 = sphi 0, %s121
      %s125 = sphi 0, %s124
      %s141 = sphi 0, %s125
      %s145 = sphi 0, %s145
      %s147 = sphi 0, %s145
      %s148 = sphi 0, %s147
      %s162 = sphi 0, %s148
      %s168 = sphi 0, %s170
      %s171 = sphi 0, %s168
      %s172 = sphi 0, %s171
      %s188 = sphi 0, %s172
      %s194 = sphi 0, %s196
      %s197 = sphi 0, %s194
      %s198 = sphi 0, %s197
      %s214 = sphi 0, %s198
    $region4: #{tpu_custom_call.1} parent=1 // loop_header_branch
      %24 = sbr.rel (%p22) target = $region8
    $region5: #{tpu_custom_call.1} parent=1 // loop_body
      %s26 = ssub.s32 %s21, 1
      %s27 = ssub.s32 %s21, 2
      %s34 = sadd.s32 1, %s29
      %p35 = scmp.ge.s32.totalorder %s34, 3
      %s36 = scalar_select %p35, 0, %s34
      %s37 = sadd.s32 1, %s28
      %s38 = scalar_select %p35, %s37, %s28
      %p39 = scmp.ge.s32.totalorder %s38, 1
      %s40 = scalar_select %p39, 0, %s38
      %s41 = ssub.s32 %s28, %s40
      %p42 = scmp.eq.s32.totalorder %s41, 0
      %s44 = sadd.s32 %s43, 1
      %s45 = scalar_select %p42, %s43, %s44
      %p48 = pneg %p42
      %p49 = scmp.eq.s32.totalorder %s21, 2
      %p50 = por %p48, %p49
      %p51 = scmp.ne.s32.totalorder %s43, %s46
      %p52 = scmp.eq.s32.totalorder %s21, 0
      %p53 = por %p51, %p52
      %p54 = scmp.ne.s32.totalorder %s43, %s46
      %p55 = scmp.eq.s32.totalorder %s26, 2
      %p56 = por %p54, %p55
      %p57 = scmp.ne.s32.totalorder %s46, %s47
      %p58 = scmp.eq.s32.totalorder %s26, 0
      %p59 = por %p57, %p58
      %p60 = scmp.ne.s32.totalorder %s46, %s47
      %p61 = scmp.eq.s32.totalorder %s27, 2
      %p62 = por %p60, %p61
      %p64 = scmp.ne.s32.totalorder %s47, %s63
      %p65 = scmp.eq.s32.totalorder %s27, 0
      %p66 = por %p64, %p65
      %s67 = ssub.s32 %s29, %s36
      %p68 = scmp.eq.s32.totalorder %s67, 0
      %s70 = sadd.s32 %s69, 1
      %s71 = scalar_select %p68, %s69, %s70
      %p74 = pneg %p68
      %p75 = scmp.eq.s32.totalorder %s21, 2
      %p76 = por %p74, %p75
      %p77 = scmp.ne.s32.totalorder %s69, %s72
      %p78 = scmp.eq.s32.totalorder %s21, 0
      %p79 = por %p77, %p78
      %p80 = scmp.ne.s32.totalorder %s69, %s72
      %p81 = scmp.eq.s32.totalorder %s26, 2
      %p82 = por %p80, %p81
      %p83 = scmp.ne.s32.totalorder %s72, %s73
      %p84 = scmp.eq.s32.totalorder %s26, 0
      %p85 = por %p83, %p84
      %p86 = scmp.ne.s32.totalorder %s72, %s73
      %p87 = scmp.eq.s32.totalorder %s27, 2
      %p88 = por %p86, %p87
      %p90 = scmp.ne.s32.totalorder %s73, %s89
      %p91 = scmp.eq.s32.totalorder %s27, 0
      %p92 = por %p90, %p91
      %s93 = ssub.s32 %s29, %s36
      %p94 = scmp.eq.s32.totalorder %s93, 0
      %s96 = sadd.s32 %s95, 1
      %s97 = scalar_select %p94, %s95, %s96
      %p100 = pneg %p94
      %p101 = scmp.eq.s32.totalorder %s21, 2
      %p102 = por %p100, %p101
      %p103 = scmp.ne.s32.totalorder %s95, %s98
      %p104 = scmp.eq.s32.totalorder %s21, 0
      %p105 = por %p103, %p104
      %p106 = scmp.ne.s32.totalorder %s95, %s98
      %p107 = scmp.eq.s32.totalorder %s26, 2
      %p108 = por %p106, %p107
      %p109 = scmp.ne.s32.totalorder %s98, %s99
      %p110 = scmp.eq.s32.totalorder %s26, 0
      %p111 = por %p109, %p110
      %p112 = scmp.ne.s32.totalorder %s98, %s99
      %p113 = scmp.eq.s32.totalorder %s27, 2
      %p114 = por %p112, %p113
      %p116 = scmp.ne.s32.totalorder %s99, %s115
      %p117 = scmp.eq.s32.totalorder %s27, 0
      %p118 = por %p116, %p117
      %s119 = ssub.s32 %s29, %s36
      %p120 = scmp.eq.s32.totalorder %s119, 0
      %s122 = sadd.s32 %s121, 1
      %s123 = scalar_select %p120, %s121, %s122
      %p126 = pneg %p120
      %p127 = scmp.eq.s32.totalorder %s21, 2
      %p128 = por %p126, %p127
      %p129 = scmp.ne.s32.totalorder %s121, %s124
      %p130 = scmp.eq.s32.totalorder %s21, 0
      %p131 = por %p129, %p130
      %p132 = scmp.ne.s32.totalorder %s121, %s124
      %p133 = scmp.eq.s32.totalorder %s26, 2
      %p134 = por %p132, %p133
      %p135 = scmp.ne.s32.totalorder %s124, %s125
      %p136 = scmp.eq.s32.totalorder %s26, 0
      %p137 = por %p135, %p136
      %p138 = scmp.ne.s32.totalorder %s124, %s125
      %p139 = scmp.eq.s32.totalorder %s27, 2
      %p140 = por %p138, %p139
      %p142 = scmp.ne.s32.totalorder %s125, %s141
      %p143 = scmp.eq.s32.totalorder %s27, 0
      %p144 = por %p142, %p143
      %s146 = sadd.s32 %s145, 1
      %p149 = scmp.eq.s32.totalorder %s21, 2
      %p150 = scmp.ne.s32.totalorder %s145, %s147
      %p151 = scmp.eq.s32.totalorder %s21, 0
      %p152 = por %p150, %p151
      %p153 = scmp.ne.s32.totalorder %s145, %s147
      %p154 = scmp.eq.s32.totalorder %s26, 2
      %p155 = por %p153, %p154
      %p156 = scmp.ne.s32.totalorder %s147, %s148
      %p157 = scmp.eq.s32.totalorder %s26, 0
      %p158 = por %p156, %p157
      %p159 = scmp.ne.s32.totalorder %s147, %s148
      %p160 = scmp.eq.s32.totalorder %s27, 2
      %p161 = por %p159, %p160
      %p163 = scmp.ne.s32.totalorder %s148, %s162
      %p164 = scmp.eq.s32.totalorder %s27, 0
      %p165 = por %p163, %p164
      %s166 = ssub.s32 %s28, %s40
      %p167 = scmp.eq.s32.totalorder %s166, 0
      %s169 = sadd.s32 %s168, 1
      %s170 = scalar_select %p167, %s168, %s169
      %p173 = pneg %p167
      %p174 = scmp.eq.s32.totalorder %s21, 2
      %p175 = por %p173, %p174
      %p176 = scmp.ne.s32.totalorder %s168, %s171
      %p177 = scmp.eq.s32.totalorder %s21, 0
      %p178 = por %p176, %p177
      %p179 = scmp.ne.s32.totalorder %s168, %s171
      %p180 = scmp.eq.s32.totalorder %s26, 2
      %p181 = por %p179, %p180
      %p182 = scmp.ne.s32.totalorder %s171, %s172
      %p183 = scmp.eq.s32.totalorder %s26, 0
      %p184 = por %p182, %p183
      %p185 = scmp.ne.s32.totalorder %s171, %s172
      %p186 = scmp.eq.s32.totalorder %s27, 2
      %p187 = por %p185, %p186
      %p189 = scmp.ne.s32.totalorder %s172, %s188
      %p190 = scmp.eq.s32.totalorder %s27, 0
      %p191 = por %p189, %p190
      %s192 = ssub.s32 %s28, %s40
      %p193 = scmp.eq.s32.totalorder %s192, 0
      %s195 = sadd.s32 %s194, 1
      %s196 = scalar_select %p193, %s194, %s195
      %p199 = pneg %p193
      %p200 = scmp.eq.s32.totalorder %s21, 2
      %p201 = por %p199, %p200
      %p202 = scmp.ne.s32.totalorder %s194, %s197
      %p203 = scmp.eq.s32.totalorder %s21, 0
      %p204 = por %p202, %p203
      %p205 = scmp.ne.s32.totalorder %s194, %s197
      %p206 = scmp.eq.s32.totalorder %s26, 2
      %p207 = por %p205, %p206
      %p208 = scmp.ne.s32.totalorder %s197, %s198
      %p209 = scmp.eq.s32.totalorder %s26, 0
      %p210 = por %p208, %p209
      %p211 = scmp.ne.s32.totalorder %s197, %s198
      %p212 = scmp.eq.s32.totalorder %s27, 2
      %p213 = por %p211, %p212
      %p215 = scmp.ne.s32.totalorder %s198, %s214
      %p216 = scmp.eq.s32.totalorder %s27, 0
      %p217 = por %p215, %p216
      %p218 = scmp.le.s32.totalorder 1, %s21
      %p219 = scmp.lt.s32.totalorder %s21, 4
      %p220 = pnand %p218, %p219
      %p221 = pneg %p220
      // Predicated region
      $region9: #{tpu_custom_call.1} parent=5 // pred_check
        _
      $region10: #{tpu_custom_call.1} parent=5 // pred_check_branch
        %223 = sbr.rel (%p220) target = $region12
      $region11: #{tpu_custom_call.1} parent=5 // pred_region
        %s224 = ssub.s32 %s21, 1
        // Predicated region
        $region13: #{tpu_custom_call.1} parent=11 // pred_check
          %p225 = pneg %p59
        $region14: #{tpu_custom_call.1} parent=11 // pred_check_branch
          %227 = sbr.rel (%p225) target = $region16
        $region15: #{tpu_custom_call.1} parent=11 // pred_region
          %s228 = smul.u32 2, %s30
          %s230 = ssub.s32 768, 768
          %231 = vsyncadd [#allocation4], %s230
          %s232 = smul.addr %s228, 3
          %s233 = smul.addr %s232, 128
          %s234 = scalar_lea.hbm %s0, %s233
          %s235 = sshll.u32 [#allocation3], 4
          %s236 = int_to_ptr.vmem [resolvable:$true] %s235
          %241 = dma.hbm_to_vmem [thread:$0]  %s234, 768, %s236, [#allocation4], 384, 384, 24
        $region16: #{tpu_custom_call.1} parent=11 // pred_fallthru
          _
        // Predicated region
        $region17: #{tpu_custom_call.1} parent=11 // pred_check
          %p242 = pneg %p158
        $region18: #{tpu_custom_call.1} parent=11 // pred_check_branch
          %244 = sbr.rel (%p242) target = $region20
        $region19: #{tpu_custom_call.1} parent=11 // pred_region
          %s246 = ssub.s32 48, 48
          %247 = vsyncadd [#allocation10], %s246
          %s249 = sshll.u32 [#allocation11], 4
          %s250 = int_to_ptr.vmem [resolvable:$true] %s249
          %252 = dma.hbm_to_vmem [thread:$0]  %s4, 48, %s250, [#allocation10]
        $region20: #{tpu_custom_call.1} parent=11 // pred_fallthru
          _
        // Predicated region
        $region21: #{tpu_custom_call.1} parent=11 // pred_check
          %p253 = pneg %p184
        $region22: #{tpu_custom_call.1} parent=11 // pred_check_branch
          %255 = sbr.rel (%p253) target = $region24
        $region23: #{tpu_custom_call.1} parent=11 // pred_region
          %s256 = smul.u32 2, %s30
          %s258 = ssub.s32 768, 768
          %259 = vsyncadd [#allocation13], %s258
          %s260 = smul.addr %s256, 3
          %s261 = smul.addr %s260, 128
          %s262 = scalar_lea.hbm %s5, %s261
          %s263 = sshll.u32 [#allocation12], 4
          %s264 = int_to_ptr.vmem [resolvable:$true] %s263
          %269 = dma.hbm_to_vmem [thread:$0]  %s262, 768, %s264, [#allocation13], 384, 384, 24
        $region24: #{tpu_custom_call.1} parent=11 // pred_fallthru
          _
      $region12: #{tpu_custom_call.1} parent=5 // pred_fallthru
        _
      %p270 = scmp.lt.s32.totalorder %s21, 3
      // Predicated region
      $region25: #{tpu_custom_call.1} parent=5 // pred_check
        %p271 = pneg %p270
      $region26: #{tpu_custom_call.1} parent=5 // pred_check_branch
        %273 = sbr.rel (%p271) target = $region28
      $region27: #{tpu_custom_call.1} parent=5 // pred_region
        // Predicated region
        $region29: #{tpu_custom_call.1} parent=27 // pred_check
          %p274 = pneg %p79
        $region30: #{tpu_custom_call.1} parent=27 // pred_check_branch
          %276 = sbr.rel (%p274) target = $region32
        $region31: #{tpu_custom_call.1} parent=27 // pred_region
          %s277 = sand.u32 %s21, 1
          %s278 = scalar_lea.sflag [#allocation7], %s277
          %s279 = sand.u32 %s69, 1
          %s280 = smul.addr %s279, 1536
          %s281 = scalar_lea.vmem [#allocation6], %s280
          %s282 = smul.u32 4, %s29
          %s284 = ssub.s32 24576, 24576
          %285 = vsyncadd %s278, %s284
          %s286 = smul.addr %s282, 128
          %s287 = scalar_lea.hbm %s1, %s286
          %s288 = sshll.u32 %s281, 4
          %s289 = int_to_ptr.vmem [resolvable:$true] %s288
          %294 = dma.hbm_to_vmem [thread:$0]  %s287, 24576, %s289, %s278, 1536, 512, 32
        $region32: #{tpu_custom_call.1} parent=27 // pred_fallthru
          _
        // Predicated region
        $region33: #{tpu_custom_call.1} parent=27 // pred_check
          %p295 = pneg %p105
        $region34: #{tpu_custom_call.1} parent=27 // pred_check_branch
          %297 = sbr.rel (%p295) target = $region36
        $region35: #{tpu_custom_call.1} parent=27 // pred_region
          %s298 = sand.u32 %s21, 1
          %s299 = scalar_lea.sflag [#allocation7], %s298
          %s300 = sand.u32 %s95, 1
          %s301 = smul.addr %s300, 4
          %s302 = scalar_lea.vmem [#allocation8], %s301
          %s303 = smul.u32 4, %s29
          %s305 = ssub.s32 64, 64
          %306 = vsyncadd %s299, %s305
          %s307 = smul.addr %s303, 16
          %s308 = scalar_lea.hbm %s2, %s307
          %s310 = sshll.u32 %s302, 4
          %s311 = int_to_ptr.vmem [resolvable:$true] %s310
          %313 = dma.hbm_to_vmem [thread:$0]  %s308, 64, %s311, %s299
        $region36: #{tpu_custom_call.1} parent=27 // pred_fallthru
          _
        // Predicated region
        $region37: #{tpu_custom_call.1} parent=27 // pred_check
          %p314 = pneg %p131
        $region38: #{tpu_custom_call.1} parent=27 // pred_check_branch
          %316 = sbr.rel (%p314) target = $region40
        $region39: #{tpu_custom_call.1} parent=27 // pred_region
          %s317 = sand.u32 %s21, 1
          %s318 = scalar_lea.sflag [#allocation10], %s317
          %s319 = sand.u32 %s121, 1
          %s320 = smul.addr %s319, 1536
          %s321 = scalar_lea.vmem [#allocation9], %s320
          %s322 = smul.u32 64, %s29
          %s324 = ssub.s32 24576, 24576
          %325 = vsyncadd %s318, %s324
          %s326 = smul.addr %s322, 3
          %s327 = smul.addr %s326, 128
          %s328 = scalar_lea.hbm %s3, %s327
          %s329 = sshll.u32 %s321, 4
          %s330 = int_to_ptr.vmem [resolvable:$true] %s329
          %335 = dma.hbm_to_vmem [thread:$0]  %s328, 24576, %s330, %s318, 384, 384, 24
        $region40: #{tpu_custom_call.1} parent=27 // pred_fallthru
          _
      $region28: #{tpu_custom_call.1} parent=5 // pred_fallthru
        _
      %p336 = scmp.le.s32.totalorder 1, %s21
      %p337 = scmp.lt.s32.totalorder %s21, 4
      %p338 = pnand %p336, %p337
      %p339 = pneg %p338
      // Predicated region
      $region41: #{tpu_custom_call.1} parent=5 // pred_check
        _
      $region42: #{tpu_custom_call.1} parent=5 // pred_check_branch
        %341 = sbr.rel (%p338) target = $region44
      $region43: #{tpu_custom_call.1} parent=5 // pred_region
        %s342 = ssub.s32 %s21, 1
        // Predicated region
        $region45: #{tpu_custom_call.1} parent=43 // pred_check
          %p343 = pneg %p59
        $region46: #{tpu_custom_call.1} parent=43 // pred_check_branch
          %345 = sbr.rel (%p343) target = $region48
        $region47: #{tpu_custom_call.1} parent=43 // pred_region
          %346 = dma.done [#allocation4], 768
        $region48: #{tpu_custom_call.1} parent=43 // pred_fallthru
          _
        %s347 = sand.u32 %s26, 1
        %s348 = scalar_lea.sflag [#allocation7], %s347
        %s349 = sand.u32 %s72, 1
        %s350 = smul.addr %s349, 1536
        %s351 = scalar_lea.vmem [#allocation6], %s350
        // Predicated region
        $region49: #{tpu_custom_call.1} parent=43 // pred_check
          %p352 = pneg %p85
        $region50: #{tpu_custom_call.1} parent=43 // pred_check_branch
          %354 = sbr.rel (%p352) target = $region52
        $region51: #{tpu_custom_call.1} parent=43 // pred_region
          %355 = dma.done %s348, 24576
        $region52: #{tpu_custom_call.1} parent=43 // pred_fallthru
          _
        %s356 = sand.u32 %s26, 1
        %s357 = scalar_lea.sflag [#allocation7], %s356
        %s358 = sand.u32 %s98, 1
        %s359 = smul.addr %s358, 4
        %s360 = scalar_lea.vmem [#allocation8], %s359
        // Predicated region
        $region53: #{tpu_custom_call.1} parent=43 // pred_check
          %p361 = pneg %p111
        $region54: #{tpu_custom_call.1} parent=43 // pred_check_branch
          %363 = sbr.rel (%p361) target = $region56
        $region55: #{tpu_custom_call.1} parent=43 // pred_region
          %364 = dma.done %s357, 64
        $region56: #{tpu_custom_call.1} parent=43 // pred_fallthru
          _
        %s365 = sand.u32 %s26, 1
        %s366 = scalar_lea.sflag [#allocation10], %s365
        %s367 = sand.u32 %s124, 1
        %s368 = smul.addr %s367, 1536
        %s369 = scalar_lea.vmem [#allocation9], %s368
        // Predicated region
        $region57: #{tpu_custom_call.1} parent=43 // pred_check
          %p370 = pneg %p137
        $region58: #{tpu_custom_call.1} parent=43 // pred_check_branch
          %372 = sbr.rel (%p370) target = $region60
        $region59: #{tpu_custom_call.1} parent=43 // pred_region
          %373 = dma.done %s366, 24576
        $region60: #{tpu_custom_call.1} parent=43 // pred_fallthru
          _
        // Predicated region
        $region61: #{tpu_custom_call.1} parent=43 // pred_check
          %p374 = pneg %p158
        $region62: #{tpu_custom_call.1} parent=43 // pred_check_branch
          %376 = sbr.rel (%p374) target = $region64
        $region63: #{tpu_custom_call.1} parent=43 // pred_region
          %377 = dma.done [#allocation10], 48
        $region64: #{tpu_custom_call.1} parent=43 // pred_fallthru
          _
        // Predicated region
        $region65: #{tpu_custom_call.1} parent=43 // pred_check
          %p378 = pneg %p184
        $region66: #{tpu_custom_call.1} parent=43 // pred_check_branch
          %380 = sbr.rel (%p378) target = $region68
        $region67: #{tpu_custom_call.1} parent=43 // pred_region
          %381 = dma.done [#allocation13], 768
        $region68: #{tpu_custom_call.1} parent=43 // pred_fallthru
          _
        %p382 = pneg %p59
        %p383 = pneg %p56
        %s384 = sand.u32 %s26, 1
        %s385 = scalar_lea.sflag [#allocation7], %s384
        %s386 = sand.u32 %s72, 1
        %s387 = smul.addr %s386, 1536
        %s388 = scalar_lea.vmem [#allocation6], %s387
        %p389 = pneg %p85
        %p390 = pneg %p82
        %s391 = sand.u32 %s26, 1
        %s392 = scalar_lea.sflag [#allocation7], %s391
        %s393 = sand.u32 %s98, 1
        %s394 = smul.addr %s393, 4
        %s395 = scalar_lea.vmem [#allocation8], %s394
        %p396 = pneg %p111
        %p397 = pneg %p108
        %s398 = sand.u32 %s26, 1
        %s399 = scalar_lea.sflag [#allocation10], %s398
        %s400 = sand.u32 %s124, 1
        %s401 = smul.addr %s400, 1536
        %s402 = scalar_lea.vmem [#allocation9], %s401
        %p403 = pneg %p137
        %p404 = pneg %p134
        %p405 = pneg %p158
        %p406 = pneg %p155
        %p407 = pneg %p184
        %p408 = pneg %p181
        %p409 = pneg %p210
        %p410 = pneg %p207
        %s411 = smul.u32 2, %s30
        %s412 = smul.u32 4, %s31
        %s413 = smul.u32 4, %s31
        %s414 = smul.u32 64, %s31
        %s415 = smul.u32 2, %s30
        %s416 = smul.u32 2, %s30
        %p417 = scmp.eq.s32.totalorder %s31, 0
        // Predicated region
        $region69: #{tpu_custom_call.1} parent=43 // pred_check
          %p418 = pneg %p417
        $region70: #{tpu_custom_call.1} parent=43 // pred_check_branch
          %420 = sbr.rel (%p418) target = $region72
        $region71: #{tpu_custom_call.1} parent=43 // pred_region
          %421 = vst [vmem:[#allocation2] sm:$0xff] 0.0
          %422 = vst [vmem:[#allocation2 + $0x8] sm:$0xff] 0.0
          %423 = vst [vmem:[#allocation2 + $0x10] sm:$0xff] 0.0
          %424 = vst [vmem:[#allocation2 + $0x18] sm:$0xff] 0.0
          %425 = vst [vmem:[#allocation2 + $0x20] sm:$0xff] 0.0
          %426 = vst [vmem:[#allocation2 + $0x28] sm:$0xff] 0.0
        $region72: #{tpu_custom_call.1} parent=43 // pred_fallthru
          _
        %v427 = vld [vmem:[#allocation3] sm:$0xff]
        %v428 = vld [vmem:[#allocation3 + $0x8] sm:$0xff]
        %v429 = vld [vmem:[#allocation3 + $0x10] sm:$0xff]
        %v430 = vld [vmem:[#allocation3 + $0x18] sm:$0xff]
        %v431 = vld [vmem:[#allocation3 + $0x20] sm:$0xff]
        %v432 = vld [vmem:[#allocation3 + $0x28] sm:$0xff]
        %v433 = vld [vmem:[%s351] sm:$0xff]
        %v434 = vld [vmem:[%s351 + $0x8] sm:$0xff]
        %v435 = vld [vmem:[%s351 + $0x10] sm:$0xff]
        %v436 = vld [vmem:[%s351 + $0x18] sm:$0xff]
        %v437 = vld [vmem:[%s351 + $0x20] sm:$0xff]
        %v438 = vld [vmem:[%s351 + $0x28] sm:$0xff]
        %v439 = vld [vmem:[%s351 + $0x30] sm:$0xff]
        %v440 = vld [vmem:[%s351 + $0x38] sm:$0xff]
        %v441 = vld [vmem:[%s351 + $0x40] sm:$0xff]
        %v442 = vld [vmem:[%s351 + $0x48] sm:$0xff]
        %v443 = vld [vmem:[%s351 + $0x50] sm:$0xff]
        %v444 = vld [vmem:[%s351 + $0x58] sm:$0xff]
        %v445 = vld [vmem:[%s351 + $0x60] sm:$0xff]
        %v446 = vld [vmem:[%s351 + $0x68] sm:$0xff]
        %v447 = vld [vmem:[%s351 + $0x70] sm:$0xff]
        %v448 = vld [vmem:[%s351 + $0x78] sm:$0xff]
        %v449 = vld [vmem:[%s351 + $0x80] sm:$0xff]
        %v450 = vld [vmem:[%s351 + $0x88] sm:$0xff]
        %v451 = vld [vmem:[%s351 + $0x90] sm:$0xff]
        %v452 = vld [vmem:[%s351 + $0x98] sm:$0xff]
        %v453 = vld [vmem:[%s351 + $0xa0] sm:$0xff]
        %v454 = vld [vmem:[%s351 + $0xa8] sm:$0xff]
        %v455 = vld [vmem:[%s351 + $0xb0] sm:$0xff]
        %v456 = vld [vmem:[%s351 + $0xb8] sm:$0xff]
        %v457 = vld [vmem:[%s351 + $0xc0] sm:$0xff]
        %v458 = vld [vmem:[%s351 + $0xc8] sm:$0xff]
        %v459 = vld [vmem:[%s351 + $0xd0] sm:$0xff]
        %v460 = vld [vmem:[%s351 + $0xd8] sm:$0xff]
        %v461 = vld [vmem:[%s351 + $0xe0] sm:$0xff]
        %v462 = vld [vmem:[%s351 + $0xe8] sm:$0xff]
        %v463 = vld [vmem:[%s351 + $0xf0] sm:$0xff]
        %v464 = vld [vmem:[%s351 + $0xf8] sm:$0xff]
        %v465 = vld [vmem:[%s351 + $0x100] sm:$0xff]
        %v466 = vld [vmem:[%s351 + $0x108] sm:$0xff]
        %v467 = vld [vmem:[%s351 + $0x110] sm:$0xff]
        %v468 = vld [vmem:[%s351 + $0x118] sm:$0xff]
        %v469 = vld [vmem:[%s351 + $0x120] sm:$0xff]
        %v470 = vld [vmem:[%s351 + $0x128] sm:$0xff]
        %v471 = vld [vmem:[%s351 + $0x130] sm:$0xff]
        %v472 = vld [vmem:[%s351 + $0x138] sm:$0xff]
        %v473 = vld [vmem:[%s351 + $0x140] sm:$0xff]
        %v474 = vld [vmem:[%s351 + $0x148] sm:$0xff]
        %v475 = vld [vmem:[%s351 + $0x150] sm:$0xff]
        %v476 = vld [vmem:[%s351 + $0x158] sm:$0xff]
        %v477 = vld [vmem:[%s351 + $0x160] sm:$0xff]
        %v478 = vld [vmem:[%s351 + $0x168] sm:$0xff]
        %v479 = vld [vmem:[%s351 + $0x170] sm:$0xff]
        %v480 = vld [vmem:[%s351 + $0x178] sm:$0xff]
        %v481 = vld [vmem:[%s351 + $0x180] sm:$0xff]
        %v482 = vld [vmem:[%s351 + $0x188] sm:$0xff]
        %v483 = vld [vmem:[%s351 + $0x190] sm:$0xff]
        %v484 = vld [vmem:[%s351 + $0x198] sm:$0xff]
        %v485 = vld [vmem:[%s351 + $0x1a0] sm:$0xff]
        %v486 = vld [vmem:[%s351 + $0x1a8] sm:$0xff]
        %v487 = vld [vmem:[%s351 + $0x1b0] sm:$0xff]
        %v488 = vld [vmem:[%s351 + $0x1b8] sm:$0xff]
        %v489 = vld [vmem:[%s351 + $0x1c0] sm:$0xff]
        %v490 = vld [vmem:[%s351 + $0x1c8] sm:$0xff]
        %v491 = vld [vmem:[%s351 + $0x1d0] sm:$0xff]
        %v492 = vld [vmem:[%s351 + $0x1d8] sm:$0xff]
        %v493 = vld [vmem:[%s351 + $0x1e0] sm:$0xff]
        %v494 = vld [vmem:[%s351 + $0x1e8] sm:$0xff]
        %v495 = vld [vmem:[%s351 + $0x1f0] sm:$0xff]
        %v496 = vld [vmem:[%s351 + $0x1f8] sm:$0xff]
        %v497 = vld [vmem:[%s351 + $0x200] sm:$0xff]
        %v498 = vld [vmem:[%s351 + $0x208] sm:$0xff]
        %v499 = vld [vmem:[%s351 + $0x210] sm:$0xff]
        %v500 = vld [vmem:[%s351 + $0x218] sm:$0xff]
        %v501 = vld [vmem:[%s351 + $0x220] sm:$0xff]
        %v502 = vld [vmem:[%s351 + $0x228] sm:$0xff]
        %v503 = vld [vmem:[%s351 + $0x230] sm:$0xff]
        %v504 = vld [vmem:[%s351 + $0x238] sm:$0xff]
        %v505 = vld [vmem:[%s351 + $0x240] sm:$0xff]
        %v506 = vld [vmem:[%s351 + $0x248] sm:$0xff]
        %v507 = vld [vmem:[%s351 + $0x250] sm:$0xff]
        %v508 = vld [vmem:[%s351 + $0x258] sm:$0xff]
        %v509 = vld [vmem:[%s351 + $0x260] sm:$0xff]
        %v510 = vld [vmem:[%s351 + $0x268] sm:$0xff]
        %v511 = vld [vmem:[%s351 + $0x270] sm:$0xff]
        %v512 = vld [vmem:[%s351 + $0x278] sm:$0xff]
        %v513 = vld [vmem:[%s351 + $0x280] sm:$0xff]
        %v514 = vld [vmem:[%s351 + $0x288] sm:$0xff]
        %v515 = vld [vmem:[%s351 + $0x290] sm:$0xff]
        %v516 = vld [vmem:[%s351 + $0x298] sm:$0xff]
        %v517 = vld [vmem:[%s351 + $0x2a0] sm:$0xff]
        %v518 = vld [vmem:[%s351 + $0x2a8] sm:$0xff]
        %v519 = vld [vmem:[%s351 + $0x2b0] sm:$0xff]
        %v520 = vld [vmem:[%s351 + $0x2b8] sm:$0xff]
        %v521 = vld [vmem:[%s351 + $0x2c0] sm:$0xff]
        %v522 = vld [vmem:[%s351 + $0x2c8] sm:$0xff]
        %v523 = vld [vmem:[%s351 + $0x2d0] sm:$0xff]
        %v524 = vld [vmem:[%s351 + $0x2d8] sm:$0xff]
        %v525 = vld [vmem:[%s351 + $0x2e0] sm:$0xff]
        %v526 = vld [vmem:[%s351 + $0x2e8] sm:$0xff]
        %v527 = vld [vmem:[%s351 + $0x2f0] sm:$0xff]
        %v528 = vld [vmem:[%s351 + $0x2f8] sm:$0xff]
        %v529 = vld [vmem:[%s351 + $0x300] sm:$0xff]
        %v530 = vld [vmem:[%s351 + $0x308] sm:$0xff]
        %v531 = vld [vmem:[%s351 + $0x310] sm:$0xff]
        %v532 = vld [vmem:[%s351 + $0x318] sm:$0xff]
        %v533 = vld [vmem:[%s351 + $0x320] sm:$0xff]
        %v534 = vld [vmem:[%s351 + $0x328] sm:$0xff]
        %v535 = vld [vmem:[%s351 + $0x330] sm:$0xff]
        %v536 = vld [vmem:[%s351 + $0x338] sm:$0xff]
        %v537 = vld [vmem:[%s351 + $0x340] sm:$0xff]
        %v538 = vld [vmem:[%s351 + $0x348] sm:$0xff]
        %v539 = vld [vmem:[%s351 + $0x350] sm:$0xff]
        %v540 = vld [vmem:[%s351 + $0x358] sm:$0xff]
        %v541 = vld [vmem:[%s351 + $0x360] sm:$0xff]
        %v542 = vld [vmem:[%s351 + $0x368] sm:$0xff]
        %v543 = vld [vmem:[%s351 + $0x370] sm:$0xff]
        %v544 = vld [vmem:[%s351 + $0x378] sm:$0xff]
        %v545 = vld [vmem:[%s351 + $0x380] sm:$0xff]
        %v546 = vld [vmem:[%s351 + $0x388] sm:$0xff]
        %v547 = vld [vmem:[%s351 + $0x390] sm:$0xff]
        %v548 = vld [vmem:[%s351 + $0x398] sm:$0xff]
        %v549 = vld [vmem:[%s351 + $0x3a0] sm:$0xff]
        %v550 = vld [vmem:[%s351 + $0x3a8] sm:$0xff]
        %v551 = vld [vmem:[%s351 + $0x3b0] sm:$0xff]
        %v552 = vld [vmem:[%s351 + $0x3b8] sm:$0xff]
        %v553 = vld [vmem:[%s351 + $0x3c0] sm:$0xff]
        %v554 = vld [vmem:[%s351 + $0x3c8] sm:$0xff]
        %v555 = vld [vmem:[%s351 + $0x3d0] sm:$0xff]
        %v556 = vld [vmem:[%s351 + $0x3d8] sm:$0xff]
        %v557 = vld [vmem:[%s351 + $0x3e0] sm:$0xff]
        %v558 = vld [vmem:[%s351 + $0x3e8] sm:$0xff]
        %v559 = vld [vmem:[%s351 + $0x3f0] sm:$0xff]
        %v560 = vld [vmem:[%s351 + $0x3f8] sm:$0xff]
        %v561 = vld [vmem:[%s351 + $0x400] sm:$0xff]
        %v562 = vld [vmem:[%s351 + $0x408] sm:$0xff]
        %v563 = vld [vmem:[%s351 + $0x410] sm:$0xff]
        %v564 = vld [vmem:[%s351 + $0x418] sm:$0xff]
        %v565 = vld [vmem:[%s351 + $0x420] sm:$0xff]
        %v566 = vld [vmem:[%s351 + $0x428] sm:$0xff]
        %v567 = vld [vmem:[%s351 + $0x430] sm:$0xff]
        %v568 = vld [vmem:[%s351 + $0x438] sm:$0xff]
        %v569 = vld [vmem:[%s351 + $0x440] sm:$0xff]
        %v570 = vld [vmem:[%s351 + $0x448] sm:$0xff]
        %v571 = vld [vmem:[%s351 + $0x450] sm:$0xff]
        %v572 = vld [vmem:[%s351 + $0x458] sm:$0xff]
        %v573 = vld [vmem:[%s351 + $0x460] sm:$0xff]
        %v574 = vld [vmem:[%s351 + $0x468] sm:$0xff]
        %v575 = vld [vmem:[%s351 + $0x470] sm:$0xff]
        %v576 = vld [vmem:[%s351 + $0x478] sm:$0xff]
        %v577 = vld [vmem:[%s351 + $0x480] sm:$0xff]
        %v578 = vld [vmem:[%s351 + $0x488] sm:$0xff]
        %v579 = vld [vmem:[%s351 + $0x490] sm:$0xff]
        %v580 = vld [vmem:[%s351 + $0x498] sm:$0xff]
        %v581 = vld [vmem:[%s351 + $0x4a0] sm:$0xff]
        %v582 = vld [vmem:[%s351 + $0x4a8] sm:$0xff]
        %v583 = vld [vmem:[%s351 + $0x4b0] sm:$0xff]
        %v584 = vld [vmem:[%s351 + $0x4b8] sm:$0xff]
        %v585 = vld [vmem:[%s351 + $0x4c0] sm:$0xff]
        %v586 = vld [vmem:[%s351 + $0x4c8] sm:$0xff]
        %v587 = vld [vmem:[%s351 + $0x4d0] sm:$0xff]
        %v588 = vld [vmem:[%s351 + $0x4d8] sm:$0xff]
        %v589 = vld [vmem:[%s351 + $0x4e0] sm:$0xff]
        %v590 = vld [vmem:[%s351 + $0x4e8] sm:$0xff]
        %v591 = vld [vmem:[%s351 + $0x4f0] sm:$0xff]
        %v592 = vld [vmem:[%s351 + $0x4f8] sm:$0xff]
        %v593 = vld [vmem:[%s351 + $0x500] sm:$0xff]
        %v594 = vld [vmem:[%s351 + $0x508] sm:$0xff]
        %v595 = vld [vmem:[%s351 + $0x510] sm:$0xff]
        %v596 = vld [vmem:[%s351 + $0x518] sm:$0xff]
        %v597 = vld [vmem:[%s351 + $0x520] sm:$0xff]
        %v598 = vld [vmem:[%s351 + $0x528] sm:$0xff]
        %v599 = vld [vmem:[%s351 + $0x530] sm:$0xff]
        %v600 = vld [vmem:[%s351 + $0x538] sm:$0xff]
        %v601 = vld [vmem:[%s351 + $0x540] sm:$0xff]
        %v602 = vld [vmem:[%s351 + $0x548] sm:$0xff]
        %v603 = vld [vmem:[%s351 + $0x550] sm:$0xff]
        %v604 = vld [vmem:[%s351 + $0x558] sm:$0xff]
        %v605 = vld [vmem:[%s351 + $0x560] sm:$0xff]
        %v606 = vld [vmem:[%s351 + $0x568] sm:$0xff]
        %v607 = vld [vmem:[%s351 + $0x570] sm:$0xff]
        %v608 = vld [vmem:[%s351 + $0x578] sm:$0xff]
        %v609 = vld [vmem:[%s351 + $0x580] sm:$0xff]
        %v610 = vld [vmem:[%s351 + $0x588] sm:$0xff]
        %v611 = vld [vmem:[%s351 + $0x590] sm:$0xff]
        %v612 = vld [vmem:[%s351 + $0x598] sm:$0xff]
        %v613 = vld [vmem:[%s351 + $0x5a0] sm:$0xff]
        %v614 = vld [vmem:[%s351 + $0x5a8] sm:$0xff]
        %v615 = vld [vmem:[%s351 + $0x5b0] sm:$0xff]
        %v616 = vld [vmem:[%s351 + $0x5b8] sm:$0xff]
        %v617 = vld [vmem:[%s351 + $0x5c0] sm:$0xff]
        %v618 = vld [vmem:[%s351 + $0x5c8] sm:$0xff]
        %v619 = vld [vmem:[%s351 + $0x5d0] sm:$0xff]
        %v620 = vld [vmem:[%s351 + $0x5d8] sm:$0xff]
        %v621 = vld [vmem:[%s351 + $0x5e0] sm:$0xff]
        %v622 = vld [vmem:[%s351 + $0x5e8] sm:$0xff]
        %v623 = vld [vmem:[%s351 + $0x5f0] sm:$0xff]
        %v624 = vld [vmem:[%s351 + $0x5f8] sm:$0xff]
        %v625 = vld [vmem:[%s360] sm:$0xf]
        %v627 = vlaneseq
        %v628 = vshrl.u32 %v627, 7
        %v629 = vsub.s32 0, %v628
        %v630 = vrot.slane %v625, %v629
        %v631 = vlaneseq
        %v632 = vshrl.u32 %v631, 7
        %v633 = vsub.s32 1, %v632
        %v634 = vrot.slane %v625, %v633
        %v635 = vlaneseq
        %v636 = vshrl.u32 %v635, 7
        %v637 = vsub.s32 2, %v636
        %v638 = vrot.slane %v625, %v637
        %v639 = vlaneseq
        %v640 = vshrl.u32 %v639, 7
        %v641 = vsub.s32 3, %v640
        %v642 = vrot.slane %v625, %v641
        %647 = vmatprep.subr.mxu0 %v494
        %648 = vmatpush1.msra.mxu0 %v493
        %649 = vmatprep.subr.mxu0 %v490
        %650 = vmatpush1.msra.mxu0 %v489
        %651 = vmatprep.subr.mxu0 %v486
        %652 = vmatpush1.msra.mxu0 %v485
        %653 = vmatprep.subr.mxu0 %v482
        %654 = vmatpush1.msra.mxu0 %v481
        %655 = vmatprep.subr.mxu0 %v478
        %656 = vmatpush1.msra.mxu0 %v477
        %657 = vmatprep.subr.mxu0 %v474
        %658 = vmatpush1.msra.mxu0 %v473
        %659 = vmatprep.subr.mxu0 %v470
        %660 = vmatpush1.msra.mxu0 %v469
        %661 = vmatprep.subr.mxu0 %v466
        %662 = vmatpush1.msra.mxu0 %v465
        %663 = vmatprep.subr.mxu0 %v462
        %664 = vmatpush1.msra.mxu0 %v461
        %665 = vmatprep.subr.mxu0 %v458
        %666 = vmatpush1.msra.mxu0 %v457
        %667 = vmatprep.subr.mxu0 %v454
        %668 = vmatpush1.msra.mxu0 %v453
        %669 = vmatprep.subr.mxu0 %v450
        %670 = vmatpush1.msra.mxu0 %v449
        %671 = vmatprep.subr.mxu0 %v446
        %672 = vmatpush1.msra.mxu0 %v445
        %673 = vmatprep.subr.mxu0 %v442
        %674 = vmatpush1.msra.mxu0 %v441
        %675 = vmatprep.subr.mxu0 %v438
        %676 = vmatpush1.msra.mxu0 %v437
        %677 = vmatprep.subr.mxu0 %v434
        %678 = vmatpush1.msra.mxu0 %v433
        %679 = vmatprep.subr.mxu0 %v558
        %680 = vmatpush2.msra.mxu0 %v557
        %681 = vmatprep.subr.mxu0 %v554
        %682 = vmatpush2.msra.mxu0 %v553
        %683 = vmatprep.subr.mxu0 %v550
        %684 = vmatpush2.msra.mxu0 %v549
        %685 = vmatprep.subr.mxu0 %v546
        %686 = vmatpush2.msra.mxu0 %v545
        %687 = vmatprep.subr.mxu0 %v542
        %688 = vmatpush2.msra.mxu0 %v541
        %689 = vmatprep.subr.mxu0 %v538
        %690 = vmatpush2.msra.mxu0 %v537
        %691 = vmatprep.subr.mxu0 %v534
        %692 = vmatpush2.msra.mxu0 %v533
        %693 = vmatprep.subr.mxu0 %v530
        %694 = vmatpush2.msra.mxu0 %v529
        %695 = vmatprep.subr.mxu0 %v526
        %696 = vmatpush2.msra.mxu0 %v525
        %697 = vmatprep.subr.mxu0 %v522
        %698 = vmatpush2.msra.mxu0 %v521
        %699 = vmatprep.subr.mxu0 %v518
        %700 = vmatpush2.msra.mxu0 %v517
        %701 = vmatprep.subr.mxu0 %v514
        %702 = vmatpush2.msra.mxu0 %v513
        %703 = vmatprep.subr.mxu0 %v510
        %704 = vmatpush2.msra.mxu0 %v509
        %705 = vmatprep.subr.mxu0 %v506
        %706 = vmatpush2.msra.mxu0 %v505
        %707 = vmatprep.subr.mxu0 %v502
        %708 = vmatpush2.msra.mxu0 %v501
        %709 = vmatprep.subr.mxu0 %v498
        %710 = vmatpush2.msra.mxu0 %v497
        %711 = vmatprep.mubr.f32.mxu0 %v428
        %712 = vmatmul.mubr.f32.gmra.mxu0 %v427
        %v713 = vpop.f32.mrf.mxu0
        %v714 = vadd.f32 %v630, %v713
        %v715 = vpop.f32.mrf.mxu0
        %v716 = vadd.f32 %v634, %v715
        %717 = vmatprep.mubr.f32.mxu0 %v431
        %718 = vmatmul.mubr.f32.gmra.mxu0 %v430
        %v719 = vpop.f32.mrf.mxu0
        %v720 = vadd.f32 %v630, %v719
        %v721 = vpop.f32.mrf.mxu0
        %v722 = vadd.f32 %v634, %v721
        %723 = vdwg.mxu0
        %724 = vmatprep.subr.mxu0 %v622
        %725 = vmatpush1.msra.mxu0 %v621
        %726 = vmatprep.subr.mxu0 %v618
        %727 = vmatpush1.msra.mxu0 %v617
        %728 = vmatprep.subr.mxu0 %v614
        %729 = vmatpush1.msra.mxu0 %v613
        %730 = vmatprep.subr.mxu0 %v610
        %731 = vmatpush1.msra.mxu0 %v609
        %732 = vmatprep.subr.mxu0 %v606
        %733 = vmatpush1.msra.mxu0 %v605
        %734 = vmatprep.subr.mxu0 %v602
        %735 = vmatpush1.msra.mxu0 %v601
        %736 = vmatprep.subr.mxu0 %v598
        %737 = vmatpush1.msra.mxu0 %v597
        %738 = vmatprep.subr.mxu0 %v594
        %739 = vmatpush1.msra.mxu0 %v593
        %740 = vmatprep.subr.mxu0 %v590
        %741 = vmatpush1.msra.mxu0 %v589
        %742 = vmatprep.subr.mxu0 %v586
        %743 = vmatpush1.msra.mxu0 %v585
        %744 = vmatprep.subr.mxu0 %v582
        %745 = vmatpush1.msra.mxu0 %v581
        %746 = vmatprep.subr.mxu0 %v578
        %747 = vmatpush1.msra.mxu0 %v577
        %748 = vmatprep.subr.mxu0 %v574
        %749 = vmatpush1.msra.mxu0 %v573
        %750 = vmatprep.subr.mxu0 %v570
        %751 = vmatpush1.msra.mxu0 %v569
        %752 = vmatprep.subr.mxu0 %v566
        %753 = vmatpush1.msra.mxu0 %v565
        %754 = vmatprep.subr.mxu0 %v562
        %755 = vmatpush1.msra.mxu0 %v561
        %756 = vmatprep.subr.mxu0 0.0
        %757 = vmatpush2.msra.mxu0 0.0
        %758 = vmatprep.subr.mxu0 0.0
        %759 = vmatpush2.msra.mxu0 0.0
        %760 = vmatprep.subr.mxu0 0.0
        %761 = vmatpush2.msra.mxu0 0.0
        %762 = vmatprep.subr.mxu0 0.0
        %763 = vmatpush2.msra.mxu0 0.0
        %764 = vmatprep.subr.mxu0 0.0
        %765 = vmatpush2.msra.mxu0 0.0
        %766 = vmatprep.subr.mxu0 0.0
        %767 = vmatpush2.msra.mxu0 0.0
        %768 = vmatprep.subr.mxu0 0.0
        %769 = vmatpush2.msra.mxu0 0.0
        %770 = vmatprep.subr.mxu0 0.0
        %771 = vmatpush2.msra.mxu0 0.0
        %772 = vmatprep.subr.mxu0 0.0
        %773 = vmatpush2.msra.mxu0 0.0
        %774 = vmatprep.subr.mxu0 0.0
        %775 = vmatpush2.msra.mxu0 0.0
        %776 = vmatprep.subr.mxu0 0.0
        %777 = vmatpush2.msra.mxu0 0.0
        %778 = vmatprep.subr.mxu0 0.0
        %779 = vmatpush2.msra.mxu0 0.0
        %780 = vmatprep.subr.mxu0 0.0
        %781 = vmatpush2.msra.mxu0 0.0
        %782 = vmatprep.subr.mxu0 0.0
        %783 = vmatpush2.msra.mxu0 0.0
        %784 = vmatprep.subr.mxu0 0.0
        %785 = vmatpush2.msra.mxu0 0.0
        %786 = vmatprep.subr.mxu0 0.0
        %787 = vmatpush2.msra.mxu0 0.0
        %788 = vmatprep.mubr.f32.mxu0 0.0
        %789 = vmatmul.mubr.f32.gmra.mxu0 %v429
        %v790 = vpop.f32.mrf.mxu0
        %v791 = vadd.f32 %v714, %v790
        %v792 = vpop.f32.mrf.mxu0
        %v793 = vadd.f32 %v716, %v792
        %794 = vmatprep.mubr.f32.mxu0 0.0
        %795 = vmatmul.mubr.f32.gmra.mxu0 %v432
        %v796 = vpop.f32.mrf.mxu0
        %v797 = vadd.f32 %v720, %v796
        %v798 = vpop.f32.mrf.mxu0
        %v799 = vadd.f32 %v722, %v798
        %800 = vdwg.mxu0
        %801 = vmatprep.subr.mxu0 %v496
        %802 = vmatpush1.msra.mxu0 %v495
        %803 = vmatprep.subr.mxu0 %v492
        %804 = vmatpush1.msra.mxu0 %v491
        %805 = vmatprep.subr.mxu0 %v488
        %806 = vmatpush1.msra.mxu0 %v487
        %807 = vmatprep.subr.mxu0 %v484
        %808 = vmatpush1.msra.mxu0 %v483
        %809 = vmatprep.subr.mxu0 %v480
        %810 = vmatpush1.msra.mxu0 %v479
        %811 = vmatprep.subr.mxu0 %v476
        %812 = vmatpush1.msra.mxu0 %v475
        %813 = vmatprep.subr.mxu0 %v472
        %814 = vmatpush1.msra.mxu0 %v471
        %815 = vmatprep.subr.mxu0 %v468
        %816 = vmatpush1.msra.mxu0 %v467
        %817 = vmatprep.subr.mxu0 %v464
        %818 = vmatpush1.msra.mxu0 %v463
        %819 = vmatprep.subr.mxu0 %v460
        %820 = vmatpush1.msra.mxu0 %v459
        %821 = vmatprep.subr.mxu0 %v456
        %822 = vmatpush1.msra.mxu0 %v455
        %823 = vmatprep.subr.mxu0 %v452
        %824 = vmatpush1.msra.mxu0 %v451
        %825 = vmatprep.subr.mxu0 %v448
        %826 = vmatpush1.msra.mxu0 %v447
        %827 = vmatprep.subr.mxu0 %v444
        %828 = vmatpush1.msra.mxu0 %v443
        %829 = vmatprep.subr.mxu0 %v440
        %830 = vmatpush1.msra.mxu0 %v439
        %831 = vmatprep.subr.mxu0 %v436
        %832 = vmatpush1.msra.mxu0 %v435
        %833 = vmatprep.subr.mxu0 %v560
        %834 = vmatpush2.msra.mxu0 %v559
        %835 = vmatprep.subr.mxu0 %v556
        %836 = vmatpush2.msra.mxu0 %v555
        %837 = vmatprep.subr.mxu0 %v552
        %838 = vmatpush2.msra.mxu0 %v551
        %839 = vmatprep.subr.mxu0 %v548
        %840 = vmatpush2.msra.mxu0 %v547
        %841 = vmatprep.subr.mxu0 %v544
        %842 = vmatpush2.msra.mxu0 %v543
        %843 = vmatprep.subr.mxu0 %v540
        %844 = vmatpush2.msra.mxu0 %v539
        %845 = vmatprep.subr.mxu0 %v536
        %846 = vmatpush2.msra.mxu0 %v535
        %847 = vmatprep.subr.mxu0 %v532
        %848 = vmatpush2.msra.mxu0 %v531
        %849 = vmatprep.subr.mxu0 %v528
        %850 = vmatpush2.msra.mxu0 %v527
        %851 = vmatprep.subr.mxu0 %v524
        %852 = vmatpush2.msra.mxu0 %v523
        %853 = vmatprep.subr.mxu0 %v520
        %854 = vmatpush2.msra.mxu0 %v519
        %855 = vmatprep.subr.mxu0 %v516
        %856 = vmatpush2.msra.mxu0 %v515
        %857 = vmatprep.subr.mxu0 %v512
        %858 = vmatpush2.msra.mxu0 %v511
        %859 = vmatprep.subr.mxu0 %v508
        %860 = vmatpush2.msra.mxu0 %v507
        %861 = vmatprep.subr.mxu0 %v504
        %862 = vmatpush2.msra.mxu0 %v503
        %863 = vmatprep.subr.mxu0 %v500
        %864 = vmatpush2.msra.mxu0 %v499
        %865 = vmatprep.mubr.f32.mxu0 %v428
        %866 = vmatmul.mubr.f32.gmra.mxu0 %v427
        %v867 = vpop.f32.mrf.mxu0
        %v868 = vadd.f32 %v638, %v867
        %v869 = vpop.f32.mrf.mxu0
        %v870 = vadd.f32 %v642, %v869
        %871 = vmatprep.mubr.f32.mxu0 %v431
        %872 = vmatmul.mubr.f32.gmra.mxu0 %v430
        %v873 = vpop.f32.mrf.mxu0
        %v874 = vadd.f32 %v638, %v873
        %v875 = vpop.f32.mrf.mxu0
        %v876 = vadd.f32 %v642, %v875
        %877 = vdwg.mxu0
        %878 = vmatprep.subr.mxu0 %v624
        %879 = vmatpush1.msra.mxu0 %v623
        %880 = vmatprep.subr.mxu0 %v620
        %881 = vmatpush1.msra.mxu0 %v619
        %882 = vmatprep.subr.mxu0 %v616
        %883 = vmatpush1.msra.mxu0 %v615
        %884 = vmatprep.subr.mxu0 %v612
        %885 = vmatpush1.msra.mxu0 %v611
        %886 = vmatprep.subr.mxu0 %v608
        %887 = vmatpush1.msra.mxu0 %v607
        %888 = vmatprep.subr.mxu0 %v604
        %889 = vmatpush1.msra.mxu0 %v603
        %890 = vmatprep.subr.mxu0 %v600
        %891 = vmatpush1.msra.mxu0 %v599
        %892 = vmatprep.subr.mxu0 %v596
        %893 = vmatpush1.msra.mxu0 %v595
        %894 = vmatprep.subr.mxu0 %v592
        %895 = vmatpush1.msra.mxu0 %v591
        %896 = vmatprep.subr.mxu0 %v588
        %897 = vmatpush1.msra.mxu0 %v587
        %898 = vmatprep.subr.mxu0 %v584
        %899 = vmatpush1.msra.mxu0 %v583
        %900 = vmatprep.subr.mxu0 %v580
        %901 = vmatpush1.msra.mxu0 %v579
        %902 = vmatprep.subr.mxu0 %v576
        %903 = vmatpush1.msra.mxu0 %v575
        %904 = vmatprep.subr.mxu0 %v572
        %905 = vmatpush1.msra.mxu0 %v571
        %906 = vmatprep.subr.mxu0 %v568
        %907 = vmatpush1.msra.mxu0 %v567
        %908 = vmatprep.subr.mxu0 %v564
        %909 = vmatpush1.msra.mxu0 %v563
        %910 = vmatprep.subr.mxu0 0.0
        %911 = vmatpush2.msra.mxu0 0.0
        %912 = vmatprep.subr.mxu0 0.0
        %913 = vmatpush2.msra.mxu0 0.0
        %914 = vmatprep.subr.mxu0 0.0
        %915 = vmatpush2.msra.mxu0 0.0
        %916 = vmatprep.subr.mxu0 0.0
        %917 = vmatpush2.msra.mxu0 0.0
        %918 = vmatprep.subr.mxu0 0.0
        %919 = vmatpush2.msra.mxu0 0.0
        %920 = vmatprep.subr.mxu0 0.0
        %921 = vmatpush2.msra.mxu0 0.0
        %922 = vmatprep.subr.mxu0 0.0
        %923 = vmatpush2.msra.mxu0 0.0
        %924 = vmatprep.subr.mxu0 0.0
        %925 = vmatpush2.msra.mxu0 0.0
        %926 = vmatprep.subr.mxu0 0.0
        %927 = vmatpush2.msra.mxu0 0.0
        %928 = vmatprep.subr.mxu0 0.0
        %929 = vmatpush2.msra.mxu0 0.0
        %930 = vmatprep.subr.mxu0 0.0
        %931 = vmatpush2.msra.mxu0 0.0
        %932 = vmatprep.subr.mxu0 0.0
        %933 = vmatpush2.msra.mxu0 0.0
        %934 = vmatprep.subr.mxu0 0.0
        %935 = vmatpush2.msra.mxu0 0.0
        %936 = vmatprep.subr.mxu0 0.0
        %937 = vmatpush2.msra.mxu0 0.0
        %938 = vmatprep.subr.mxu0 0.0
        %939 = vmatpush2.msra.mxu0 0.0
        %940 = vmatprep.subr.mxu0 0.0
        %941 = vmatpush2.msra.mxu0 0.0
        %942 = vmatprep.mubr.f32.mxu0 0.0
        %943 = vmatmul.mubr.f32.gmra.mxu0 %v429
        %v944 = vpop.f32.mrf.mxu0
        %v945 = vadd.f32 %v868, %v944
        %v946 = vpop.f32.mrf.mxu0
        %v947 = vadd.f32 %v870, %v946
        %948 = vmatprep.mubr.f32.mxu0 0.0
        %949 = vmatmul.mubr.f32.gmra.mxu0 %v432
        %v950 = vpop.f32.mrf.mxu0
        %v951 = vadd.f32 %v874, %v950
        %v952 = vpop.f32.mrf.mxu0
        %v953 = vadd.f32 %v876, %v952
        %954 = vdwg.mxu0
        %v955 = vmax.f32 %v791, 0.0
        %v956 = vmax.f32 %v793, 0.0
        %v957 = vmax.f32 %v945, 0.0
        %v958 = vmax.f32 %v947, 0.0
        %v959 = vmax.f32 %v797, 0.0
        %v960 = vmax.f32 %v799, 0.0
        %v961 = vmax.f32 %v951, 0.0
        %v962 = vmax.f32 %v953, 0.0
        %v963 = vld [vmem:[#allocation2] sm:$0xff]
        %v964 = vld [vmem:[#allocation2 + $0x8] sm:$0xff]
        %v965 = vld [vmem:[#allocation2 + $0x10] sm:$0xff]
        %v966 = vld [vmem:[#allocation2 + $0x18] sm:$0xff]
        %v967 = vld [vmem:[#allocation2 + $0x20] sm:$0xff]
        %v968 = vld [vmem:[#allocation2 + $0x28] sm:$0xff]
        %v969 = vld [vmem:[%s369] sm:$0xff]
        %v970 = vld [vmem:[%s369 + $0x8] sm:$0xff]
        %v971 = vld [vmem:[%s369 + $0x10] sm:$0xff]
        %v972 = vld [vmem:[%s369 + $0x18] sm:$0xff]
        %v973 = vld [vmem:[%s369 + $0x20] sm:$0xff]
        %v974 = vld [vmem:[%s369 + $0x28] sm:$0xff]
        %v975 = vld [vmem:[%s369 + $0x30] sm:$0xff]
        %v976 = vld [vmem:[%s369 + $0x38] sm:$0xff]
        %v977 = vld [vmem:[%s369 + $0x40] sm:$0xff]
        %v978 = vld [vmem:[%s369 + $0x48] sm:$0xff]
        %v979 = vld [vmem:[%s369 + $0x50] sm:$0xff]
        %v980 = vld [vmem:[%s369 + $0x58] sm:$0xff]
        %v981 = vld [vmem:[%s369 + $0x60] sm:$0xff]
        %v982 = vld [vmem:[%s369 + $0x68] sm:$0xff]
        %v983 = vld [vmem:[%s369 + $0x70] sm:$0xff]
        %v984 = vld [vmem:[%s369 + $0x78] sm:$0xff]
        %v985 = vld [vmem:[%s369 + $0x80] sm:$0xff]
        %v986 = vld [vmem:[%s369 + $0x88] sm:$0xff]
        %v987 = vld [vmem:[%s369 + $0x90] sm:$0xff]
        %v988 = vld [vmem:[%s369 + $0x98] sm:$0xff]
        %v989 = vld [vmem:[%s369 + $0xa0] sm:$0xff]
        %v990 = vld [vmem:[%s369 + $0xa8] sm:$0xff]
        %v991 = vld [vmem:[%s369 + $0xb0] sm:$0xff]
        %v992 = vld [vmem:[%s369 + $0xb8] sm:$0xff]
        %v993 = vld [vmem:[%s369 + $0xc0] sm:$0xff]
        %v994 = vld [vmem:[%s369 + $0xc8] sm:$0xff]
        %v995 = vld [vmem:[%s369 + $0xd0] sm:$0xff]
        %v996 = vld [vmem:[%s369 + $0xd8] sm:$0xff]
        %v997 = vld [vmem:[%s369 + $0xe0] sm:$0xff]
        %v998 = vld [vmem:[%s369 + $0xe8] sm:$0xff]
        %v999 = vld [vmem:[%s369 + $0xf0] sm:$0xff]
        %v1000 = vld [vmem:[%s369 + $0xf8] sm:$0xff]
        %v1001 = vld [vmem:[%s369 + $0x100] sm:$0xff]
        %v1002 = vld [vmem:[%s369 + $0x108] sm:$0xff]
        %v1003 = vld [vmem:[%s369 + $0x110] sm:$0xff]
        %v1004 = vld [vmem:[%s369 + $0x118] sm:$0xff]
        %v1005 = vld [vmem:[%s369 + $0x120] sm:$0xff]
        %v1006 = vld [vmem:[%s369 + $0x128] sm:$0xff]
        %v1007 = vld [vmem:[%s369 + $0x130] sm:$0xff]
        %v1008 = vld [vmem:[%s369 + $0x138] sm:$0xff]
        %v1009 = vld [vmem:[%s369 + $0x140] sm:$0xff]
        %v1010 = vld [vmem:[%s369 + $0x148] sm:$0xff]
        %v1011 = vld [vmem:[%s369 + $0x150] sm:$0xff]
        %v1012 = vld [vmem:[%s369 + $0x158] sm:$0xff]
        %v1013 = vld [vmem:[%s369 + $0x160] sm:$0xff]
        %v1014 = vld [vmem:[%s369 + $0x168] sm:$0xff]
        %v1015 = vld [vmem:[%s369 + $0x170] sm:$0xff]
        %v1016 = vld [vmem:[%s369 + $0x178] sm:$0xff]
        %v1017 = vld [vmem:[%s369 + $0x180] sm:$0xff]
        %v1018 = vld [vmem:[%s369 + $0x188] sm:$0xff]
        %v1019 = vld [vmem:[%s369 + $0x190] sm:$0xff]
        %v1020 = vld [vmem:[%s369 + $0x198] sm:$0xff]
        %v1021 = vld [vmem:[%s369 + $0x1a0] sm:$0xff]
        %v1022 = vld [vmem:[%s369 + $0x1a8] sm:$0xff]
        %v1023 = vld [vmem:[%s369 + $0x1b0] sm:$0xff]
        %v1024 = vld [vmem:[%s369 + $0x1b8] sm:$0xff]
        %v1025 = vld [vmem:[%s369 + $0x1c0] sm:$0xff]
        %v1026 = vld [vmem:[%s369 + $0x1c8] sm:$0xff]
        %v1027 = vld [vmem:[%s369 + $0x1d0] sm:$0xff]
        %v1028 = vld [vmem:[%s369 + $0x1d8] sm:$0xff]
        %v1029 = vld [vmem:[%s369 + $0x1e0] sm:$0xff]
        %v1030 = vld [vmem:[%s369 + $0x1e8] sm:$0xff]
        %v1031 = vld [vmem:[%s369 + $0x1f0] sm:$0xff]
        %v1032 = vld [vmem:[%s369 + $0x1f8] sm:$0xff]
        %v1033 = vld [vmem:[%s369 + $0x200] sm:$0xff]
        %v1034 = vld [vmem:[%s369 + $0x208] sm:$0xff]
        %v1035 = vld [vmem:[%s369 + $0x210] sm:$0xff]
        %v1036 = vld [vmem:[%s369 + $0x218] sm:$0xff]
        %v1037 = vld [vmem:[%s369 + $0x220] sm:$0xff]
        %v1038 = vld [vmem:[%s369 + $0x228] sm:$0xff]
        %v1039 = vld [vmem:[%s369 + $0x230] sm:$0xff]
        %v1040 = vld [vmem:[%s369 + $0x238] sm:$0xff]
        %v1041 = vld [vmem:[%s369 + $0x240] sm:$0xff]
        %v1042 = vld [vmem:[%s369 + $0x248] sm:$0xff]
        %v1043 = vld [vmem:[%s369 + $0x250] sm:$0xff]
        %v1044 = vld [vmem:[%s369 + $0x258] sm:$0xff]
        %v1045 = vld [vmem:[%s369 + $0x260] sm:$0xff]
        %v1046 = vld [vmem:[%s369 + $0x268] sm:$0xff]
        %v1047 = vld [vmem:[%s369 + $0x270] sm:$0xff]
        %v1048 = vld [vmem:[%s369 + $0x278] sm:$0xff]
        %v1049 = vld [vmem:[%s369 + $0x280] sm:$0xff]
        %v1050 = vld [vmem:[%s369 + $0x288] sm:$0xff]
        %v1051 = vld [vmem:[%s369 + $0x290] sm:$0xff]
        %v1052 = vld [vmem:[%s369 + $0x298] sm:$0xff]
        %v1053 = vld [vmem:[%s369 + $0x2a0] sm:$0xff]
        %v1054 = vld [vmem:[%s369 + $0x2a8] sm:$0xff]
        %v1055 = vld [vmem:[%s369 + $0x2b0] sm:$0xff]
        %v1056 = vld [vmem:[%s369 + $0x2b8] sm:$0xff]
        %v1057 = vld [vmem:[%s369 + $0x2c0] sm:$0xff]
        %v1058 = vld [vmem:[%s369 + $0x2c8] sm:$0xff]
        %v1059 = vld [vmem:[%s369 + $0x2d0] sm:$0xff]
        %v1060 = vld [vmem:[%s369 + $0x2d8] sm:$0xff]
        %v1061 = vld [vmem:[%s369 + $0x2e0] sm:$0xff]
        %v1062 = vld [vmem:[%s369 + $0x2e8] sm:$0xff]
        %v1063 = vld [vmem:[%s369 + $0x2f0] sm:$0xff]
        %v1064 = vld [vmem:[%s369 + $0x2f8] sm:$0xff]
        %v1065 = vld [vmem:[%s369 + $0x300] sm:$0xff]
        %v1066 = vld [vmem:[%s369 + $0x308] sm:$0xff]
        %v1067 = vld [vmem:[%s369 + $0x310] sm:$0xff]
        %v1068 = vld [vmem:[%s369 + $0x318] sm:$0xff]
        %v1069 = vld [vmem:[%s369 + $0x320] sm:$0xff]
        %v1070 = vld [vmem:[%s369 + $0x328] sm:$0xff]
        %v1071 = vld [vmem:[%s369 + $0x330] sm:$0xff]
        %v1072 = vld [vmem:[%s369 + $0x338] sm:$0xff]
        %v1073 = vld [vmem:[%s369 + $0x340] sm:$0xff]
        %v1074 = vld [vmem:[%s369 + $0x348] sm:$0xff]
        %v1075 = vld [vmem:[%s369 + $0x350] sm:$0xff]
        %v1076 = vld [vmem:[%s369 + $0x358] sm:$0xff]
        %v1077 = vld [vmem:[%s369 + $0x360] sm:$0xff]
        %v1078 = vld [vmem:[%s369 + $0x368] sm:$0xff]
        %v1079 = vld [vmem:[%s369 + $0x370] sm:$0xff]
        %v1080 = vld [vmem:[%s369 + $0x378] sm:$0xff]
        %v1081 = vld [vmem:[%s369 + $0x380] sm:$0xff]
        %v1082 = vld [vmem:[%s369 + $0x388] sm:$0xff]
        %v1083 = vld [vmem:[%s369 + $0x390] sm:$0xff]
        %v1084 = vld [vmem:[%s369 + $0x398] sm:$0xff]
        %v1085 = vld [vmem:[%s369 + $0x3a0] sm:$0xff]
        %v1086 = vld [vmem:[%s369 + $0x3a8] sm:$0xff]
        %v1087 = vld [vmem:[%s369 + $0x3b0] sm:$0xff]
        %v1088 = vld [vmem:[%s369 + $0x3b8] sm:$0xff]
        %v1089 = vld [vmem:[%s369 + $0x3c0] sm:$0xff]
        %v1090 = vld [vmem:[%s369 + $0x3c8] sm:$0xff]
        %v1091 = vld [vmem:[%s369 + $0x3d0] sm:$0xff]
        %v1092 = vld [vmem:[%s369 + $0x3d8] sm:$0xff]
        %v1093 = vld [vmem:[%s369 + $0x3e0] sm:$0xff]
        %v1094 = vld [vmem:[%s369 + $0x3e8] sm:$0xff]
        %v1095 = vld [vmem:[%s369 + $0x3f0] sm:$0xff]
        %v1096 = vld [vmem:[%s369 + $0x3f8] sm:$0xff]
        %v1097 = vld [vmem:[%s369 + $0x400] sm:$0xff]
        %v1098 = vld [vmem:[%s369 + $0x408] sm:$0xff]
        %v1099 = vld [vmem:[%s369 + $0x410] sm:$0xff]
        %v1100 = vld [vmem:[%s369 + $0x418] sm:$0xff]
        %v1101 = vld [vmem:[%s369 + $0x420] sm:$0xff]
        %v1102 = vld [vmem:[%s369 + $0x428] sm:$0xff]
        %v1103 = vld [vmem:[%s369 + $0x430] sm:$0xff]
        %v1104 = vld [vmem:[%s369 + $0x438] sm:$0xff]
        %v1105 = vld [vmem:[%s369 + $0x440] sm:$0xff]
        %v1106 = vld [vmem:[%s369 + $0x448] sm:$0xff]
        %v1107 = vld [vmem:[%s369 + $0x450] sm:$0xff]
        %v1108 = vld [vmem:[%s369 + $0x458] sm:$0xff]
        %v1109 = vld [vmem:[%s369 + $0x460] sm:$0xff]
        %v1110 = vld [vmem:[%s369 + $0x468] sm:$0xff]
        %v1111 = vld [vmem:[%s369 + $0x470] sm:$0xff]
        %v1112 = vld [vmem:[%s369 + $0x478] sm:$0xff]
        %v1113 = vld [vmem:[%s369 + $0x480] sm:$0xff]
        %v1114 = vld [vmem:[%s369 + $0x488] sm:$0xff]
        %v1115 = vld [vmem:[%s369 + $0x490] sm:$0xff]
        %v1116 = vld [vmem:[%s369 + $0x498] sm:$0xff]
        %v1117 = vld [vmem:[%s369 + $0x4a0] sm:$0xff]
        %v1118 = vld [vmem:[%s369 + $0x4a8] sm:$0xff]
        %v1119 = vld [vmem:[%s369 + $0x4b0] sm:$0xff]
        %v1120 = vld [vmem:[%s369 + $0x4b8] sm:$0xff]
        %v1121 = vld [vmem:[%s369 + $0x4c0] sm:$0xff]
        %v1122 = vld [vmem:[%s369 + $0x4c8] sm:$0xff]
        %v1123 = vld [vmem:[%s369 + $0x4d0] sm:$0xff]
        %v1124 = vld [vmem:[%s369 + $0x4d8] sm:$0xff]
        %v1125 = vld [vmem:[%s369 + $0x4e0] sm:$0xff]
        %v1126 = vld [vmem:[%s369 + $0x4e8] sm:$0xff]
        %v1127 = vld [vmem:[%s369 + $0x4f0] sm:$0xff]
        %v1128 = vld [vmem:[%s369 + $0x4f8] sm:$0xff]
        %v1129 = vld [vmem:[%s369 + $0x500] sm:$0xff]
        %v1130 = vld [vmem:[%s369 + $0x508] sm:$0xff]
        %v1131 = vld [vmem:[%s369 + $0x510] sm:$0xff]
        %v1132 = vld [vmem:[%s369 + $0x518] sm:$0xff]
        %v1133 = vld [vmem:[%s369 + $0x520] sm:$0xff]
        %v1134 = vld [vmem:[%s369 + $0x528] sm:$0xff]
        %v1135 = vld [vmem:[%s369 + $0x530] sm:$0xff]
        %v1136 = vld [vmem:[%s369 + $0x538] sm:$0xff]
        %v1137 = vld [vmem:[%s369 + $0x540] sm:$0xff]
        %v1138 = vld [vmem:[%s369 + $0x548] sm:$0xff]
        %v1139 = vld [vmem:[%s369 + $0x550] sm:$0xff]
        %v1140 = vld [vmem:[%s369 + $0x558] sm:$0xff]
        %v1141 = vld [vmem:[%s369 + $0x560] sm:$0xff]
        %v1142 = vld [vmem:[%s369 + $0x568] sm:$0xff]
        %v1143 = vld [vmem:[%s369 + $0x570] sm:$0xff]
        %v1144 = vld [vmem:[%s369 + $0x578] sm:$0xff]
        %v1145 = vld [vmem:[%s369 + $0x580] sm:$0xff]
        %v1146 = vld [vmem:[%s369 + $0x588] sm:$0xff]
        %v1147 = vld [vmem:[%s369 + $0x590] sm:$0xff]
        %v1148 = vld [vmem:[%s369 + $0x598] sm:$0xff]
        %v1149 = vld [vmem:[%s369 + $0x5a0] sm:$0xff]
        %v1150 = vld [vmem:[%s369 + $0x5a8] sm:$0xff]
        %v1151 = vld [vmem:[%s369 + $0x5b0] sm:$0xff]
        %v1152 = vld [vmem:[%s369 + $0x5b8] sm:$0xff]
        %v1153 = vld [vmem:[%s369 + $0x5c0] sm:$0xff]
        %v1154 = vld [vmem:[%s369 + $0x5c8] sm:$0xff]
        %v1155 = vld [vmem:[%s369 + $0x5d0] sm:$0xff]
        %v1156 = vld [vmem:[%s369 + $0x5d8] sm:$0xff]
        %v1157 = vld [vmem:[%s369 + $0x5e0] sm:$0xff]
        %v1158 = vld [vmem:[%s369 + $0x5e8] sm:$0xff]
        %v1159 = vld [vmem:[%s369 + $0x5f0] sm:$0xff]
        %v1160 = vld [vmem:[%s369 + $0x5f8] sm:$0xff]
        %1161 = vmatprep.subr.mxu0 %v1015
        %1162 = vmatpush1.msra.mxu0 %v1014
        %1163 = vmatprep.subr.mxu0 %v1012
        %1164 = vmatpush1.msra.mxu0 %v1011
        %1165 = vmatprep.subr.mxu0 %v1009
        %1166 = vmatpush1.msra.mxu0 %v1008
        %1167 = vmatprep.subr.mxu0 %v1006
        %1168 = vmatpush1.msra.mxu0 %v1005
        %1169 = vmatprep.subr.mxu0 %v1003
        %1170 = vmatpush1.msra.mxu0 %v1002
        %1171 = vmatprep.subr.mxu0 %v1000
        %1172 = vmatpush1.msra.mxu0 %v999
        %1173 = vmatprep.subr.mxu0 %v997
        %1174 = vmatpush1.msra.mxu0 %v996
        %1175 = vmatprep.subr.mxu0 %v994
        %1176 = vmatpush1.msra.mxu0 %v993
        %1177 = vmatprep.subr.mxu0 %v991
        %1178 = vmatpush1.msra.mxu0 %v990
        %1179 = vmatprep.subr.mxu0 %v988
        %1180 = vmatpush1.msra.mxu0 %v987
        %1181 = vmatprep.subr.mxu0 %v985
        %1182 = vmatpush1.msra.mxu0 %v984
        %1183 = vmatprep.subr.mxu0 %v982
        %1184 = vmatpush1.msra.mxu0 %v981
        %1185 = vmatprep.subr.mxu0 %v979
        %1186 = vmatpush1.msra.mxu0 %v978
        %1187 = vmatprep.subr.mxu0 %v976
        %1188 = vmatpush1.msra.mxu0 %v975
        %1189 = vmatprep.subr.mxu0 %v973
        %1190 = vmatpush1.msra.mxu0 %v972
        %1191 = vmatprep.subr.mxu0 %v970
        %1192 = vmatpush1.msra.mxu0 %v969
        %1193 = vmatprep.subr.mxu0 %v1063
        %1194 = vmatpush2.msra.mxu0 %v1062
        %1195 = vmatprep.subr.mxu0 %v1060
        %1196 = vmatpush2.msra.mxu0 %v1059
        %1197 = vmatprep.subr.mxu0 %v1057
        %1198 = vmatpush2.msra.mxu0 %v1056
        %1199 = vmatprep.subr.mxu0 %v1054
        %1200 = vmatpush2.msra.mxu0 %v1053
        %1201 = vmatprep.subr.mxu0 %v1051
        %1202 = vmatpush2.msra.mxu0 %v1050
        %1203 = vmatprep.subr.mxu0 %v1048
        %1204 = vmatpush2.msra.mxu0 %v1047
        %1205 = vmatprep.subr.mxu0 %v1045
        %1206 = vmatpush2.msra.mxu0 %v1044
        %1207 = vmatprep.subr.mxu0 %v1042
        %1208 = vmatpush2.msra.mxu0 %v1041
        %1209 = vmatprep.subr.mxu0 %v1039
        %1210 = vmatpush2.msra.mxu0 %v1038
        %1211 = vmatprep.subr.mxu0 %v1036
        %1212 = vmatpush2.msra.mxu0 %v1035
        %1213 = vmatprep.subr.mxu0 %v1033
        %1214 = vmatpush2.msra.mxu0 %v1032
        %1215 = vmatprep.subr.mxu0 %v1030
        %1216 = vmatpush2.msra.mxu0 %v1029
        %1217 = vmatprep.subr.mxu0 %v1027
        %1218 = vmatpush2.msra.mxu0 %v1026
        %1219 = vmatprep.subr.mxu0 %v1024
        %1220 = vmatpush2.msra.mxu0 %v1023
        %1221 = vmatprep.subr.mxu0 %v1021
        %1222 = vmatpush2.msra.mxu0 %v1020
        %1223 = vmatprep.subr.mxu0 %v1018
        %1224 = vmatpush2.msra.mxu0 %v1017
        %1225 = vmatprep.mubr.f32.mxu0 %v956
        %1226 = vmatmul.mubr.f32.gmra.mxu0 %v955
        %v1227 = vpop.f32.mrf.mxu0
        %v1228 = vadd.f32 0.0, %v1227
        %v1229 = vpop.f32.mrf.mxu0
        %v1230 = vadd.f32 0.0, %v1229
        %1231 = vmatprep.mubr.f32.mxu0 %v960
        %1232 = vmatmul.mubr.f32.gmra.mxu0 %v959
        %v1233 = vpop.f32.mrf.mxu0
        %v1234 = vadd.f32 0.0, %v1233
        %v1235 = vpop.f32.mrf.mxu0
        %v1236 = vadd.f32 0.0, %v1235
        %1237 = vdwg.mxu0
        %1238 = vmatprep.subr.mxu0 %v1111
        %1239 = vmatpush1.msra.mxu0 %v1110
        %1240 = vmatprep.subr.mxu0 %v1108
        %1241 = vmatpush1.msra.mxu0 %v1107
        %1242 = vmatprep.subr.mxu0 %v1105
        %1243 = vmatpush1.msra.mxu0 %v1104
        %1244 = vmatprep.subr.mxu0 %v1102
        %1245 = vmatpush1.msra.mxu0 %v1101
        %1246 = vmatprep.subr.mxu0 %v1099
        %1247 = vmatpush1.msra.mxu0 %v1098
        %1248 = vmatprep.subr.mxu0 %v1096
        %1249 = vmatpush1.msra.mxu0 %v1095
        %1250 = vmatprep.subr.mxu0 %v1093
        %1251 = vmatpush1.msra.mxu0 %v1092
        %1252 = vmatprep.subr.mxu0 %v1090
        %1253 = vmatpush1.msra.mxu0 %v1089
        %1254 = vmatprep.subr.mxu0 %v1087
        %1255 = vmatpush1.msra.mxu0 %v1086
        %1256 = vmatprep.subr.mxu0 %v1084
        %1257 = vmatpush1.msra.mxu0 %v1083
        %1258 = vmatprep.subr.mxu0 %v1081
        %1259 = vmatpush1.msra.mxu0 %v1080
        %1260 = vmatprep.subr.mxu0 %v1078
        %1261 = vmatpush1.msra.mxu0 %v1077
        %1262 = vmatprep.subr.mxu0 %v1075
        %1263 = vmatpush1.msra.mxu0 %v1074
        %1264 = vmatprep.subr.mxu0 %v1072
        %1265 = vmatpush1.msra.mxu0 %v1071
        %1266 = vmatprep.subr.mxu0 %v1069
        %1267 = vmatpush1.msra.mxu0 %v1068
        %1268 = vmatprep.subr.mxu0 %v1066
        %1269 = vmatpush1.msra.mxu0 %v1065
        %1270 = vmatprep.subr.mxu0 %v1159
        %1271 = vmatpush2.msra.mxu0 %v1158
        %1272 = vmatprep.subr.mxu0 %v1156
        %1273 = vmatpush2.msra.mxu0 %v1155
        %1274 = vmatprep.subr.mxu0 %v1153
        %1275 = vmatpush2.msra.mxu0 %v1152
        %1276 = vmatprep.subr.mxu0 %v1150
        %1277 = vmatpush2.msra.mxu0 %v1149
        %1278 = vmatprep.subr.mxu0 %v1147
        %1279 = vmatpush2.msra.mxu0 %v1146
        %1280 = vmatprep.subr.mxu0 %v1144
        %1281 = vmatpush2.msra.mxu0 %v1143
        %1282 = vmatprep.subr.mxu0 %v1141
        %1283 = vmatpush2.msra.mxu0 %v1140
        %1284 = vmatprep.subr.mxu0 %v1138
        %1285 = vmatpush2.msra.mxu0 %v1137
        %1286 = vmatprep.subr.mxu0 %v1135
        %1287 = vmatpush2.msra.mxu0 %v1134
        %1288 = vmatprep.subr.mxu0 %v1132
        %1289 = vmatpush2.msra.mxu0 %v1131
        %1290 = vmatprep.subr.mxu0 %v1129
        %1291 = vmatpush2.msra.mxu0 %v1128
        %1292 = vmatprep.subr.mxu0 %v1126
        %1293 = vmatpush2.msra.mxu0 %v1125
        %1294 = vmatprep.subr.mxu0 %v1123
        %1295 = vmatpush2.msra.mxu0 %v1122
        %1296 = vmatprep.subr.mxu0 %v1120
        %1297 = vmatpush2.msra.mxu0 %v1119
        %1298 = vmatprep.subr.mxu0 %v1117
        %1299 = vmatpush2.msra.mxu0 %v1116
        %1300 = vmatprep.subr.mxu0 %v1114
        %1301 = vmatpush2.msra.mxu0 %v1113
        %1302 = vmatprep.mubr.f32.mxu0 %v958
        %1303 = vmatmul.mubr.f32.gmra.mxu0 %v957
        %v1304 = vpop.f32.mrf.mxu0
        %v1305 = vadd.f32 %v1228, %v1304
        %v1306 = vpop.f32.mrf.mxu0
        %v1307 = vadd.f32 %v1230, %v1306
        %1308 = vmatprep.mubr.f32.mxu0 %v962
        %1309 = vmatmul.mubr.f32.gmra.mxu0 %v961
        %v1310 = vpop.f32.mrf.mxu0
        %v1311 = vadd.f32 %v1234, %v1310
        %v1312 = vpop.f32.mrf.mxu0
        %v1313 = vadd.f32 %v1236, %v1312
        %1314 = vdwg.mxu0
        %1315 = vmatprep.subr.mxu0 0.0
        %1316 = vmatpush1.msra.mxu0 %v1016
        %1317 = vmatprep.subr.mxu0 0.0
        %1318 = vmatpush1.msra.mxu0 %v1013
        %1319 = vmatprep.subr.mxu0 0.0
        %1320 = vmatpush1.msra.mxu0 %v1010
        %1321 = vmatprep.subr.mxu0 0.0
        %1322 = vmatpush1.msra.mxu0 %v1007
        %1323 = vmatprep.subr.mxu0 0.0
        %1324 = vmatpush1.msra.mxu0 %v1004
        %1325 = vmatprep.subr.mxu0 0.0
        %1326 = vmatpush1.msra.mxu0 %v1001
        %1327 = vmatprep.subr.mxu0 0.0
        %1328 = vmatpush1.msra.mxu0 %v998
        %1329 = vmatprep.subr.mxu0 0.0
        %1330 = vmatpush1.msra.mxu0 %v995
        %1331 = vmatprep.subr.mxu0 0.0
        %1332 = vmatpush1.msra.mxu0 %v992
        %1333 = vmatprep.subr.mxu0 0.0
        %1334 = vmatpush1.msra.mxu0 %v989
        %1335 = vmatprep.subr.mxu0 0.0
        %1336 = vmatpush1.msra.mxu0 %v986
        %1337 = vmatprep.subr.mxu0 0.0
        %1338 = vmatpush1.msra.mxu0 %v983
        %1339 = vmatprep.subr.mxu0 0.0
        %1340 = vmatpush1.msra.mxu0 %v980
        %1341 = vmatprep.subr.mxu0 0.0
        %1342 = vmatpush1.msra.mxu0 %v977
        %1343 = vmatprep.subr.mxu0 0.0
        %1344 = vmatpush1.msra.mxu0 %v974
        %1345 = vmatprep.subr.mxu0 0.0
        %1346 = vmatpush1.msra.mxu0 %v971
        %1347 = vmatprep.subr.mxu0 0.0
        %1348 = vmatpush2.msra.mxu0 %v1064
        %1349 = vmatprep.subr.mxu0 0.0
        %1350 = vmatpush2.msra.mxu0 %v1061
        %1351 = vmatprep.subr.mxu0 0.0
        %1352 = vmatpush2.msra.mxu0 %v1058
        %1353 = vmatprep.subr.mxu0 0.0
        %1354 = vmatpush2.msra.mxu0 %v1055
        %1355 = vmatprep.subr.mxu0 0.0
        %1356 = vmatpush2.msra.mxu0 %v1052
        %1357 = vmatprep.subr.mxu0 0.0
        %1358 = vmatpush2.msra.mxu0 %v1049
        %1359 = vmatprep.subr.mxu0 0.0
        %1360 = vmatpush2.msra.mxu0 %v1046
        %1361 = vmatprep.subr.mxu0 0.0
        %1362 = vmatpush2.msra.mxu0 %v1043
        %1363 = vmatprep.subr.mxu0 0.0
        %1364 = vmatpush2.msra.mxu0 %v1040
        %1365 = vmatprep.subr.mxu0 0.0
        %1366 = vmatpush2.msra.mxu0 %v1037
        %1367 = vmatprep.subr.mxu0 0.0
        %1368 = vmatpush2.msra.mxu0 %v1034
        %1369 = vmatprep.subr.mxu0 0.0
        %1370 = vmatpush2.msra.mxu0 %v1031
        %1371 = vmatprep.subr.mxu0 0.0
        %1372 = vmatpush2.msra.mxu0 %v1028
        %1373 = vmatprep.subr.mxu0 0.0
        %1374 = vmatpush2.msra.mxu0 %v1025
        %1375 = vmatprep.subr.mxu0 0.0
        %1376 = vmatpush2.msra.mxu0 %v1022
        %1377 = vmatprep.subr.mxu0 0.0
        %1378 = vmatpush2.msra.mxu0 %v1019
        %1379 = vmatprep.mubr.f32.mxu0 %v956
        %1380 = vmatmul.mubr.f32.gmra.mxu0 %v955
        %v1381 = vpop.f32.mrf.mxu0
        %v1382 = vadd.f32 0.0, %v1381
        %v1383 = vpop.f32.mrf.mxu0
        %1384 = vmatprep.mubr.f32.mxu0 %v960
        %1385 = vmatmul.mubr.f32.gmra.mxu0 %v959
        %v1386 = vpop.f32.mrf.mxu0
        %v1387 = vadd.f32 0.0, %v1386
        %v1388 = vpop.f32.mrf.mxu0
        %1389 = vdwg.mxu0
        %1390 = vmatprep.subr.mxu0 0.0
        %1391 = vmatpush1.msra.mxu0 %v1112
        %1392 = vmatprep.subr.mxu0 0.0
        %1393 = vmatpush1.msra.mxu0 %v1109
        %1394 = vmatprep.subr.mxu0 0.0
        %1395 = vmatpush1.msra.mxu0 %v1106
        %1396 = vmatprep.subr.mxu0 0.0
        %1397 = vmatpush1.msra.mxu0 %v1103
        %1398 = vmatprep.subr.mxu0 0.0
        %1399 = vmatpush1.msra.mxu0 %v1100
        %1400 = vmatprep.subr.mxu0 0.0
        %1401 = vmatpush1.msra.mxu0 %v1097
        %1402 = vmatprep.subr.mxu0 0.0
        %1403 = vmatpush1.msra.mxu0 %v1094
        %1404 = vmatprep.subr.mxu0 0.0
        %1405 = vmatpush1.msra.mxu0 %v1091
        %1406 = vmatprep.subr.mxu0 0.0
        %1407 = vmatpush1.msra.mxu0 %v1088
        %1408 = vmatprep.subr.mxu0 0.0
        %1409 = vmatpush1.msra.mxu0 %v1085
        %1410 = vmatprep.subr.mxu0 0.0
        %1411 = vmatpush1.msra.mxu0 %v1082
        %1412 = vmatprep.subr.mxu0 0.0
        %1413 = vmatpush1.msra.mxu0 %v1079
        %1414 = vmatprep.subr.mxu0 0.0
        %1415 = vmatpush1.msra.mxu0 %v1076
        %1416 = vmatprep.subr.mxu0 0.0
        %1417 = vmatpush1.msra.mxu0 %v1073
        %1418 = vmatprep.subr.mxu0 0.0
        %1419 = vmatpush1.msra.mxu0 %v1070
        %1420 = vmatprep.subr.mxu0 0.0
        %1421 = vmatpush1.msra.mxu0 %v1067
        %1422 = vmatprep.subr.mxu0 0.0
        %1423 = vmatpush2.msra.mxu0 %v1160
        %1424 = vmatprep.subr.mxu0 0.0
        %1425 = vmatpush2.msra.mxu0 %v1157
        %1426 = vmatprep.subr.mxu0 0.0
        %1427 = vmatpush2.msra.mxu0 %v1154
        %1428 = vmatprep.subr.mxu0 0.0
        %1429 = vmatpush2.msra.mxu0 %v1151
        %1430 = vmatprep.subr.mxu0 0.0
        %1431 = vmatpush2.msra.mxu0 %v1148
        %1432 = vmatprep.subr.mxu0 0.0
        %1433 = vmatpush2.msra.mxu0 %v1145
        %1434 = vmatprep.subr.mxu0 0.0
        %1435 = vmatpush2.msra.mxu0 %v1142
        %1436 = vmatprep.subr.mxu0 0.0
        %1437 = vmatpush2.msra.mxu0 %v1139
        %1438 = vmatprep.subr.mxu0 0.0
        %1439 = vmatpush2.msra.mxu0 %v1136
        %1440 = vmatprep.subr.mxu0 0.0
        %1441 = vmatpush2.msra.mxu0 %v1133
        %1442 = vmatprep.subr.mxu0 0.0
        %1443 = vmatpush2.msra.mxu0 %v1130
        %1444 = vmatprep.subr.mxu0 0.0
        %1445 = vmatpush2.msra.mxu0 %v1127
        %1446 = vmatprep.subr.mxu0 0.0
        %1447 = vmatpush2.msra.mxu0 %v1124
        %1448 = vmatprep.subr.mxu0 0.0
        %1449 = vmatpush2.msra.mxu0 %v1121
        %1450 = vmatprep.subr.mxu0 0.0
        %1451 = vmatpush2.msra.mxu0 %v1118
        %1452 = vmatprep.subr.mxu0 0.0
        %1453 = vmatpush2.msra.mxu0 %v1115
        %1454 = vmatprep.mubr.f32.mxu0 %v958
        %1455 = vmatmul.mubr.f32.gmra.mxu0 %v957
        %v1456 = vpop.f32.mrf.mxu0
        %v1457 = vadd.f32 %v1382, %v1456
        %v1458 = vpop.f32.mrf.mxu0
        %1459 = vmatprep.mubr.f32.mxu0 %v962
        %1460 = vmatmul.mubr.f32.gmra.mxu0 %v961
        %v1461 = vpop.f32.mrf.mxu0
        %v1462 = vadd.f32 %v1387, %v1461
        %v1463 = vpop.f32.mrf.mxu0
        %1464 = vdwg.mxu0
        %v1465 = vadd.f32 %v963, %v1305
        %v1466 = vadd.f32 %v964, %v1307
        %v1467 = vadd.f32 %v965, %v1457
        %v1468 = vadd.f32 %v966, %v1311
        %v1469 = vadd.f32 %v967, %v1313
        %v1470 = vadd.f32 %v968, %v1462
        %1471 = vst [vmem:[#allocation2] sm:$0xff] %v1465
        %1472 = vst [vmem:[#allocation2 + $0x8] sm:$0xff] %v1466
        %1473 = vst [vmem:[#allocation2 + $0x10] sm:$0xff] %v1467
        %1474 = vst [vmem:[#allocation2 + $0x18] sm:$0xff] %v1468
        %1475 = vst [vmem:[#allocation2 + $0x20] sm:$0xff] %v1469
        %1476 = vst [vmem:[#allocation2 + $0x28] sm:$0xff] %v1470
        %p1477 = scmp.eq.s32.totalorder %s31, 2
        // Predicated region
        $region73: #{tpu_custom_call.1} parent=43 // pred_check
          %p1478 = pneg %p1477
        $region74: #{tpu_custom_call.1} parent=43 // pred_check_branch
          %1480 = sbr.rel (%p1478) target = $region76
        $region75: #{tpu_custom_call.1} parent=43 // pred_region
          %v1481 = vld [vmem:[#allocation2] sm:$0xff]
          %v1482 = vld [vmem:[#allocation2 + $0x8] sm:$0xff]
          %v1483 = vld [vmem:[#allocation2 + $0x10] sm:$0xff]
          %v1484 = vld [vmem:[#allocation2 + $0x18] sm:$0xff]
          %v1485 = vld [vmem:[#allocation2 + $0x20] sm:$0xff]
          %v1486 = vld [vmem:[#allocation2 + $0x28] sm:$0xff]
          %v1487 = vld [vmem:[#allocation11] sm:$0x7]
          %v1489 = vlaneseq
          %v1490 = vshrl.u32 %v1489, 7
          %v1491 = vsub.s32 0, %v1490
          %v1492 = vrot.slane %v1487, %v1491
          %v1493 = vlaneseq
          %v1494 = vshrl.u32 %v1493, 7
          %v1495 = vsub.s32 1, %v1494
          %v1496 = vrot.slane %v1487, %v1495
          %v1497 = vlaneseq
          %v1498 = vshrl.u32 %v1497, 7
          %v1499 = vsub.s32 2, %v1498
          %v1500 = vrot.slane %v1487, %v1499
          %v1504 = vadd.f32 %v1481, %v1492
          %v1505 = vadd.f32 %v1482, %v1496
          %v1506 = vadd.f32 %v1483, %v1500
          %v1507 = vadd.f32 %v1484, %v1492
          %v1508 = vadd.f32 %v1485, %v1496
          %v1509 = vadd.f32 %v1486, %v1500
          %v1510 = vld [vmem:[#allocation12] sm:$0xff]
          %v1511 = vld [vmem:[#allocation12 + $0x8] sm:$0xff]
          %v1512 = vld [vmem:[#allocation12 + $0x10] sm:$0xff]
          %v1513 = vld [vmem:[#allocation12 + $0x18] sm:$0xff]
          %v1514 = vld [vmem:[#allocation12 + $0x20] sm:$0xff]
          %v1515 = vld [vmem:[#allocation12 + $0x28] sm:$0xff]
          %v1516 = vmul.f32 %v1504, %v1510
          %v1517 = vmul.f32 %v1505, %v1511
          %v1518 = vmul.f32 %v1506, %v1512
          %v1519 = vmul.f32 %v1507, %v1513
          %v1520 = vmul.f32 %v1508, %v1514
          %v1521 = vmul.f32 %v1509, %v1515
          %1522 = vst [vmem:[#allocation14] sm:$0xff] %v1516
          %1523 = vst [vmem:[#allocation14 + $0x8] sm:$0xff] %v1517
          %1524 = vst [vmem:[#allocation14 + $0x10] sm:$0xff] %v1518
          %1525 = vst [vmem:[#allocation14 + $0x18] sm:$0xff] %v1519
          %1526 = vst [vmem:[#allocation14 + $0x20] sm:$0xff] %v1520
          %1527 = vst [vmem:[#allocation14 + $0x28] sm:$0xff] %v1521
        $region76: #{tpu_custom_call.1} parent=43 // pred_fallthru
          _
        // Predicated region
        $region77: #{tpu_custom_call.1} parent=43 // pred_check
          %p1528 = pneg %p207
        $region78: #{tpu_custom_call.1} parent=43 // pred_check_branch
          %1530 = sbr.rel (%p1528) target = $region80
        $region79: #{tpu_custom_call.1} parent=43 // pred_region
          %s1531 = smul.u32 2, %s30
          %s1533 = ssub.s32 768, 768
          %1534 = vsyncadd [#allocation5], %s1533
          %s1535 = smul.addr %s1531, 3
          %s1536 = smul.addr %s1535, 128
          %s1537 = scalar_lea.hbm %s6, %s1536
          %s1538 = sshll.u32 [#allocation14], 4
          %s1539 = int_to_ptr.vmem [resolvable:$true] %s1538
          %1544 = dma.vmem_to_hbm [thread:$0]  %s1539, 768, %s1537, [#allocation5], 384, 384, 24
        $region80: #{tpu_custom_call.1} parent=43 // pred_fallthru
          _
        // Predicated region
        $region81: #{tpu_custom_call.1} parent=43 // pred_check
          %p1545 = pneg %p207
        $region82: #{tpu_custom_call.1} parent=43 // pred_check_branch
          %1547 = sbr.rel (%p1545) target = $region84
        $region83: #{tpu_custom_call.1} parent=43 // pred_region
          %1548 = dma.done [#allocation5], 768
        $region84: #{tpu_custom_call.1} parent=43 // pred_fallthru
          _
      $region44: #{tpu_custom_call.1} parent=5 // pred_fallthru
        _
      %p1549 = scmp.le.s32.totalorder 2, %s21
      // Predicated region
      $region85: #{tpu_custom_call.1} parent=5 // pred_check
        %p1550 = pneg %p1549
      $region86: #{tpu_custom_call.1} parent=5 // pred_check_branch
        %1552 = sbr.rel (%p1550) target = $region88
      $region87: #{tpu_custom_call.1} parent=5 // pred_region
        %s1553 = ssub.s32 %s21, 2
      $region88: #{tpu_custom_call.1} parent=5 // pred_fallthru
        _
    $region6: #{tpu_custom_call.1} parent=1 // loop_footer
      %s25 = sadd.s32 1, %s21
    $region7: #{tpu_custom_call.1} parent=1 // loop_footer_branch
      %20 = sbr.rel target = $region3
    $region8: #{tpu_custom_call.1} parent=1 // loop_exit
      _
    %1554 = vsyncpa [#allocation4], 1
    %s1555 = scalar_lea.sflag [#allocation4], 1
    %1556 = vsyncpa %s1555, 1
    %1557 = vsyncpa [#allocation7], 1
    %s1558 = scalar_lea.sflag [#allocation7], 1
    %1559 = vsyncpa %s1558, 1
    %1560 = vsyncpa [#allocation10], 1
    %s1561 = scalar_lea.sflag [#allocation10], 1
    %1562 = vsyncpa %s1561, 1
    %1563 = vsyncpa [#allocation13], 1
    %1564 = vsyncpa [#allocation5], 1
    %s1565 = scalar_lea.sflag [#allocation5], 1
    %1566 = vsyncpa %s1565, 1

</llo_original>
